<compile_context>
chip_gen: v7x
topology: tpu7x:2x2x1
jax: 0.10.0
libtpu: 0.0.40
codegen_flags: <defaults>
</compile_context>

<pallas_src>
import functools
import math

import jax
import jax.numpy as jnp
from jax import lax
from jax.experimental import pallas as pl
from jax.experimental.pallas import tpu as pltpu

GN_EPS = 1e-5  # torch.nn.GroupNorm default eps


def _attention_head_kernel(x_ref, gamma_ref, beta_ref, wqkv_ref, bqkv_ref,
                           wo_ref, bo_ref, o_ref, *, matmul_dtype):
    """One grid step handles a small static block of batch elements.

    Shapes (channel-first):
      x_ref:    (BB, C, N)       gamma/beta: (C, 1)
      wqkv_ref: (3D, C)          bqkv_ref:   (3D, 1)   (Q rows pre-scaled by 1/sqrt(D))
      wo_ref:   (D, D)           bo_ref:     (D, 1)
      o_ref:    (BB, D, N)
    """
    bb = x_ref.shape[0]
    d = wo_ref.shape[0]

    gamma = gamma_ref[...]                               # (C, 1)
    beta = beta_ref[...]                                 # (C, 1)
    w_qkv = wqkv_ref[...].astype(matmul_dtype)           # (3D, C)
    b_qkv = bqkv_ref[...]                                # (3D, 1) f32
    w_o = wo_ref[...].astype(matmul_dtype)               # (D, D)
    b_o = bo_ref[...]                                    # (D, 1)

    # Static unroll over the (small) batch sub-block.
    for b in range(bb):
        x = x_ref[b].astype(jnp.float32)                 # (C, N)

        # GroupNorm(num_groups=C, num_channels=C): per-channel stats over the
        # spatial (lane) axis, biased variance, affine gamma/beta. All f32.
        mean = jnp.mean(x, axis=1, keepdims=True)        # (C, 1)
        var = jnp.mean((x - mean) ** 2, axis=1, keepdims=True)
        xn = (x - mean) * lax.rsqrt(var + GN_EPS)
        xn = xn * gamma + beta                           # (C, N)

        # Fused Q|K|V 1x1 convs: one (3D, C) @ (C, N) matmul + one bias add.
        qkv = jnp.dot(w_qkv, xn.astype(matmul_dtype),
                      preferred_element_type=jnp.float32) + b_qkv      # (3D, N)
        q = qkv[0:d]                                     # (D, N), already * 1/sqrt(D)
        k = qkv[d:2 * d]                                 # (D, N)
        v = qkv[2 * d:3 * d]                             # (D, N)

        # affinity[n, m] = sum_d q[d, n] * k[d, m].
        # Only the tiny (D, N) q tile is transposed (never an (N, *) operand),
        # feeding a plain NN matmul; k is consumed in place.
        aff = jnp.dot(q.T.astype(matmul_dtype), k.astype(matmul_dtype),
                      preferred_element_type=jnp.float32)              # (N, N)

        # Numerically stable softmax over keys (last axis), f32 throughout.
        aff = aff - jnp.max(aff, axis=-1, keepdims=True)
        p = jnp.exp(aff)
        denom = jnp.sum(p, axis=-1, keepdims=True)       # (N, 1)
        r = pl.reciprocal(denom, approx=True)            # EUP vrcp
        r = r * (2.0 - denom * r)                        # 1 Newton step -> ~f32 exact
        p = p * r

        # attention kept channel-first: att[d, n] = sum_m v[d, m] * p[n, m]
        # (NT dot_general; no transpose of p or v is materialized).
        att = lax.dot_general(v.astype(matmul_dtype), p.astype(matmul_dtype),
                              dimension_numbers=(((1,), (1,)), ((), ())),
                              preferred_element_type=jnp.float32)      # (D, N)

        # Output 1x1 conv, still channel-first -> lane-dense (D, N) store.
        out = jnp.dot(w_o, att.astype(matmul_dtype),
                      preferred_element_type=jnp.float32) + b_o        # (D, N)
        o_ref[b] = out.astype(o_ref.dtype)


def attention_head_forward(x_nchw, params, *, batch_block=None,
                           matmul_dtype=jnp.float32, interpret=False):
    """x_nchw: (B, C, H, W). Returns (B, D, H, W) like the PyTorch module.

    Params use the PyTorch Conv2d convention: wq/wk/wv (D, C), wo (D, D),
    biases (D,), GroupNorm gamma/beta (C,).
    """
    B, C, H, W = x_nchw.shape
    N = H * W
    D = params["wq"].shape[0]

    # Native NCHW layout: (B, C, H, W) -> (B, C, N) is a pure reshape (no
    # transpose, no extra HBM round trip). Same for the output below.
    x_seq = x_nchw.reshape(B, C, N)

    # Fold 1/sqrt(D) into the Q rows once, on the (tiny) weights/bias.
    scale = 1.0 / math.sqrt(float(D))
    w_qkv = jnp.concatenate(
        [params["wq"] * scale, params["wk"], params["wv"]], axis=0)      # (3D, C)
    b_qkv = jnp.concatenate(
        [params["bq"] * scale, params["bk"], params["bv"]], axis=0
    ).reshape(3 * D, 1)                                                  # (3D, 1)
    gamma = params["gn_gamma"].reshape(C, 1)
    beta = params["gn_beta"].reshape(C, 1)
    w_o = params["wo"]                                                   # (D, D)
    b_o = params["bo"].reshape(D, 1)

    # Batch several elements per grid step to amortize per-step pipeline
    # overhead; for the demo the whole batch fits in one step.
    if batch_block is None:
        batch_block = B if B <= 4 else 1
    assert B % batch_block == 0, "batch must be divisible by batch_block"
    grid = (B // batch_block,)

    rep = lambda shape: pl.BlockSpec(shape, lambda g: (0,) * len(shape))

    kernel = functools.partial(_attention_head_kernel, matmul_dtype=matmul_dtype)

    out_seq = pl.pallas_call(
        kernel,
        out_shape=jax.ShapeDtypeStruct((B, D, N), x_nchw.dtype),
        grid_spec=pltpu.PrefetchScalarGridSpec(
            num_scalar_prefetch=0,
            grid=grid,
            in_specs=[
                pl.BlockSpec((batch_block, C, N), lambda g: (g, 0, 0)),  # x
                rep((C, 1)), rep((C, 1)),                                # gamma, beta
                rep((3 * D, C)), rep((3 * D, 1)),                        # fused QKV w, b
                rep((D, D)), rep((D, 1)),                                # wo, bo
            ],
            out_specs=pl.BlockSpec((batch_block, D, N), lambda g: (g, 0, 0)),
        ),
        compiler_params=pltpu.CompilerParams(
            dimension_semantics=("parallel",),
            vmem_limit_bytes=32 * 1024 * 1024,
        ),
        interpret=interpret,
    )(x_seq, gamma, beta, w_qkv, b_qkv, w_o, b_o)

    # (B, D, N) -> (B, D, H, W): pure reshape, already channel-first.
    return out_seq.reshape(B, D, H, W)


def _reference_forward(x, params):
    """Pure-JAX reference mirroring the PyTorch forward (for validation)."""
    B, C, H, W = x.shape
    N = H * W
    D = params["wq"].shape[0]
    xf = x.astype(jnp.float32)
    mean = xf.mean(axis=(2, 3), keepdims=True)
    var = ((xf - mean) ** 2).mean(axis=(2, 3), keepdims=True)
    xn = (xf - mean) / jnp.sqrt(var + GN_EPS)
    xn = xn * params["gn_gamma"].reshape(1, C, 1, 1) + params["gn_beta"].reshape(1, C, 1, 1)
    xs = jnp.transpose(xn.reshape(B, C, N), (0, 2, 1))             # (B, N, C)
    q = xs @ params["wq"].T + params["bq"]
    k = xs @ params["wk"].T + params["bk"]
    v = xs @ params["wv"].T + params["bv"]
    aff = jnp.einsum("bnd,bmd->bnm", q, k) / jnp.sqrt(jnp.float32(D))
    aff = jax.nn.softmax(aff, axis=2)
    att = jnp.einsum("bnm,bmd->bnd", aff, v)
    out = att @ params["wo"].T + params["bo"]
    return jnp.transpose(out, (0, 2, 1)).reshape(B, D, H, W)


def _init_params(key, channels, value_channels):
    ks = jax.random.split(key, 10)
    s = 0.1
    return {
        # GroupNorm affine (randomized so the test exercises the affine path).
        "gn_gamma": 1.0 + s * jax.random.normal(ks[8], (channels,), jnp.float32),
        "gn_beta": s * jax.random.normal(ks[9], (channels,), jnp.float32),
        # Conv2d 1x1 weights in torch (out_channels, in_channels) convention.
        "wq": s * jax.random.normal(ks[0], (value_channels, channels), jnp.float32),
        "bq": s * jax.random.normal(ks[1], (value_channels,), jnp.float32),
        "wk": s * jax.random.normal(ks[2], (value_channels, channels), jnp.float32),
        "bk": s * jax.random.normal(ks[3], (value_channels,), jnp.float32),
        "wv": s * jax.random.normal(ks[4], (value_channels, channels), jnp.float32),
        "bv": s * jax.random.normal(ks[5], (value_channels,), jnp.float32),
        "wo": s * jax.random.normal(ks[6], (value_channels, value_channels), jnp.float32),
        "bo": s * jax.random.normal(ks[7], (value_channels,), jnp.float32),
    }


if __name__ == "__main__":
    B, C, H, W = 2, 4, 16, 16
    value_channels = 8

    key = jax.random.PRNGKey(0)
    k_x, k_p = jax.random.split(key)
    x = jax.random.normal(k_x, (B, C, H, W), jnp.float32)
    params = _init_params(k_p, C, value_channels)

    # matmul_dtype=jnp.bfloat16 is recommended on v6e/v7x for larger C/D; kept
    # f32 here so the demo stays within the strict 1e-4 reference tolerance.
    fwd = jax.jit(attention_head_forward)
    out = jax.block_until_ready(fwd(x, params))

    ref = jax.block_until_ready(_reference_forward(x, params))
    assert out.shape == (B, value_channels, H, W)
    max_err = float(jnp.max(jnp.abs(out - ref)))
    assert jnp.allclose(out, ref, atol=1e-4, rtol=1e-4), f"mismatch vs reference (max err {max_err})"

    print("KERNEL_OK")
</pallas_src>

<mosaic_0001>
module attributes {stable_mosaic.version = 11 : i64} {
  func.func @_attention_head_kernel(%arg0: i32, %arg1: memref<2x4x256xf32, #tpu.memory_space<vmem>>, %arg2: memref<4x1xf32, #tpu.memory_space<vmem>>, %arg3: memref<4x1xf32, #tpu.memory_space<vmem>>, %arg4: memref<24x4xf32, #tpu.memory_space<vmem>>, %arg5: memref<24x1xf32, #tpu.memory_space<vmem>>, %arg6: memref<8x8xf32, #tpu.memory_space<vmem>>, %arg7: memref<8x1xf32, #tpu.memory_space<vmem>>, %arg8: memref<2x8x256xf32, #tpu.memory_space<vmem>>) attributes {dimension_semantics = [#tpu.dimension_semantics<parallel>], iteration_bounds = array<i64: 1>, scalar_prefetch = 0 : i64, scratch_operands = 0 : i64, tpu.core_type = #tpu.core_type<tc>, window_params = [{transform_indices = @transform_0, window_bounds = array<i64: 2, 4, 256>}, {pipeline_mode = #tpu.pipeline_mode<synchronous>, transform_indices = @transform_1, window_bounds = array<i64: 4, 1>}, {pipeline_mode = #tpu.pipeline_mode<synchronous>, transform_indices = @transform_2, window_bounds = array<i64: 4, 1>}, {pipeline_mode = #tpu.pipeline_mode<synchronous>, transform_indices = @transform_3, window_bounds = array<i64: 24, 4>}, {pipeline_mode = #tpu.pipeline_mode<synchronous>, transform_indices = @transform_4, window_bounds = array<i64: 24, 1>}, {pipeline_mode = #tpu.pipeline_mode<synchronous>, transform_indices = @transform_5, window_bounds = array<i64: 8, 8>}, {pipeline_mode = #tpu.pipeline_mode<synchronous>, transform_indices = @transform_6, window_bounds = array<i64: 8, 1>}, {transform_indices = @transform_7, window_bounds = array<i64: 2, 8, 256>}]} {
    %c0 = arith.constant 0 : index
    %c0_0 = arith.constant 0 : index
    %0 = vector.load %arg2[%c0, %c0_0] : memref<4x1xf32, #tpu.memory_space<vmem>>, vector<4x1xf32>
    %c0_1 = arith.constant 0 : index
    %c0_2 = arith.constant 0 : index
    %1 = vector.load %arg3[%c0_1, %c0_2] : memref<4x1xf32, #tpu.memory_space<vmem>>, vector<4x1xf32>
    %c0_3 = arith.constant 0 : index
    %c0_4 = arith.constant 0 : index
    %2 = vector.load %arg4[%c0_3, %c0_4] : memref<24x4xf32, #tpu.memory_space<vmem>>, vector<24x4xf32>
    %c0_5 = arith.constant 0 : index
    %c0_6 = arith.constant 0 : index
    %3 = vector.load %arg5[%c0_5, %c0_6] : memref<24x1xf32, #tpu.memory_space<vmem>>, vector<24x1xf32>
    %c0_7 = arith.constant 0 : index
    %c0_8 = arith.constant 0 : index
    %4 = vector.load %arg6[%c0_7, %c0_8] : memref<8x8xf32, #tpu.memory_space<vmem>>, vector<8x8xf32>
    %c0_9 = arith.constant 0 : index
    %c0_10 = arith.constant 0 : index
    %5 = vector.load %arg7[%c0_9, %c0_10] : memref<8x1xf32, #tpu.memory_space<vmem>>, vector<8x1xf32>
    %c0_11 = arith.constant 0 : index
    %c0_12 = arith.constant 0 : index
    %c0_13 = arith.constant 0 : index
    %6 = vector.load %arg1[%c0_11, %c0_12, %c0_13] : memref<2x4x256xf32, #tpu.memory_space<vmem>>, vector<1x4x256xf32>
    %7 = vector.shape_cast %6 : vector<1x4x256xf32> to vector<4x256xf32>
    %cst = arith.constant dense<0.000000e+00> : vector<4xf32>
    %8 = vector.multi_reduction <add>, %7, %cst [1] : vector<4x256xf32> to vector<4xf32>
    %9 = vector.shape_cast %8 : vector<4xf32> to vector<4x1xf32>
    %cst_14 = arith.constant 2.560000e+02 : f32
    %10 = vector.broadcast %cst_14 : f32 to vector<4x1xf32>
    %11 = arith.divf %9, %10 : vector<4x1xf32>
    %12 = vector.broadcast %11 : vector<4x1xf32> to vector<4x256xf32>
    %13 = arith.subf %7, %12 : vector<4x256xf32>
    %14 = arith.mulf %13, %13 : vector<4x256xf32>
    %cst_15 = arith.constant dense<0.000000e+00> : vector<4xf32>
    %15 = vector.multi_reduction <add>, %14, %cst_15 [1] : vector<4x256xf32> to vector<4xf32>
    %16 = vector.shape_cast %15 : vector<4xf32> to vector<4x1xf32>
    %cst_16 = arith.constant 2.560000e+02 : f32
    %17 = vector.broadcast %cst_16 : f32 to vector<4x1xf32>
    %18 = arith.divf %16, %17 : vector<4x1xf32>
    %19 = vector.broadcast %11 : vector<4x1xf32> to vector<4x256xf32>
    %20 = arith.subf %7, %19 : vector<4x256xf32>
    %cst_17 = arith.constant 9.99999974E-6 : f32
    %21 = vector.broadcast %cst_17 : f32 to vector<4x1xf32>
    %22 = arith.addf %18, %21 : vector<4x1xf32>
    %23 = math.rsqrt %22 : vector<4x1xf32>
    %24 = vector.broadcast %23 : vector<4x1xf32> to vector<4x256xf32>
    %25 = arith.mulf %20, %24 : vector<4x256xf32>
    %26 = vector.broadcast %0 : vector<4x1xf32> to vector<4x256xf32>
    %27 = arith.mulf %25, %26 : vector<4x256xf32>
    %28 = vector.broadcast %1 : vector<4x1xf32> to vector<4x256xf32>
    %29 = arith.addf %27, %28 : vector<4x256xf32>
    %cst_18 = arith.constant dense<0.000000e+00> : vector<24x256xf32>
    %30 = tpu.matmul %2, %29, %cst_18 {dimension_numbers = #tpu.dot_dimension_numbers<[1], [0], [0], [1], [0, 0, 1, 1], [], []>} : vector<24x4xf32>, vector<4x256xf32>, vector<24x256xf32> -> vector<24x256xf32>
    %31 = vector.broadcast %3 : vector<24x1xf32> to vector<24x256xf32>
    %32 = arith.addf %30, %31 : vector<24x256xf32>
    %33 = vector.extract_strided_slice %32 {offsets = [0, 0], sizes = [8, 256], strides = [1, 1]} : vector<24x256xf32> to vector<8x256xf32>
    %34 = vector.extract_strided_slice %32 {offsets = [8, 0], sizes = [8, 256], strides = [1, 1]} : vector<24x256xf32> to vector<8x256xf32>
    %35 = vector.extract_strided_slice %32 {offsets = [16, 0], sizes = [8, 256], strides = [1, 1]} : vector<24x256xf32> to vector<8x256xf32>
    %36 = tpu.transpose %33, [1, 0] : vector<8x256xf32> -> vector<256x8xf32>
    %cst_19 = arith.constant dense<0.000000e+00> : vector<256x256xf32>
    %37 = tpu.matmul %36, %34, %cst_19 {dimension_numbers = #tpu.dot_dimension_numbers<[1], [0], [0], [1], [0, 0, 1, 1], [], []>} : vector<256x8xf32>, vector<8x256xf32>, vector<256x256xf32> -> vector<256x256xf32>
    %cst_20 = arith.constant dense<0xFF800000> : vector<256xf32>
    %38 = vector.multi_reduction <maximumf>, %37, %cst_20 [1] : vector<256x256xf32> to vector<256xf32>
    %39 = vector.shape_cast %38 : vector<256xf32> to vector<256x1xf32>
    %40 = vector.broadcast %39 : vector<256x1xf32> to vector<256x256xf32>
    %41 = arith.subf %37, %40 : vector<256x256xf32>
    %42 = math.exp %41 : vector<256x256xf32>
    %cst_21 = arith.constant dense<0.000000e+00> : vector<256xf32>
    %43 = vector.multi_reduction <add>, %42, %cst_21 [1] : vector<256x256xf32> to vector<256xf32>
    %44 = vector.shape_cast %43 : vector<256xf32> to vector<256x1xf32>
    %45 = tpu.reciprocal %44 {approx = true} : vector<256x1xf32> -> vector<256x1xf32>
    %46 = arith.mulf %44, %45 : vector<256x1xf32>
    %cst_22 = arith.constant 2.000000e+00 : f32
    %47 = vector.broadcast %cst_22 : f32 to vector<256x1xf32>
    %48 = arith.subf %47, %46 : vector<256x1xf32>
    %49 = arith.mulf %45, %48 : vector<256x1xf32>
    %50 = vector.broadcast %49 : vector<256x1xf32> to vector<256x256xf32>
    %51 = arith.mulf %42, %50 : vector<256x256xf32>
    %cst_23 = arith.constant dense<0.000000e+00> : vector<8x256xf32>
    %52 = tpu.matmul %35, %51, %cst_23 {dimension_numbers = #tpu.dot_dimension_numbers<[1], [1], [0], [0], [0, 0, 1, 0], [], []>} : vector<8x256xf32>, vector<256x256xf32>, vector<8x256xf32> -> vector<8x256xf32>
    %cst_24 = arith.constant dense<0.000000e+00> : vector<8x256xf32>
    %53 = tpu.matmul %4, %52, %cst_24 {dimension_numbers = #tpu.dot_dimension_numbers<[1], [0], [0], [1], [0, 0, 1, 1], [], []>} : vector<8x8xf32>, vector<8x256xf32>, vector<8x256xf32> -> vector<8x256xf32>
    %54 = vector.broadcast %5 : vector<8x1xf32> to vector<8x256xf32>
    %55 = arith.addf %53, %54 : vector<8x256xf32>
    %c0_25 = arith.constant 0 : index
    %c0_26 = arith.constant 0 : index
    %c0_27 = arith.constant 0 : index
    %56 = vector.load %arg8[%c0_25, %c0_26, %c0_27] : memref<2x8x256xf32, #tpu.memory_space<vmem>>, vector<1x8x256xf32>
    %57 = vector.shape_cast %56 : vector<1x8x256xf32> to vector<8x256xf32>
    %58 = vector.shape_cast %55 : vector<8x256xf32> to vector<1x8x256xf32>
    tpu.vector_store %arg8[%c0_25, %c0_26, %c0_27], %58 {strides = array<i32>} : memref<2x8x256xf32, #tpu.memory_space<vmem>>, vector<1x8x256xf32>,
    %c1 = arith.constant 1 : index
    %c0_28 = arith.constant 0 : index
    %c0_29 = arith.constant 0 : index
    %59 = vector.load %arg1[%c1, %c0_28, %c0_29] : memref<2x4x256xf32, #tpu.memory_space<vmem>>, vector<1x4x256xf32>
    %60 = vector.shape_cast %59 : vector<1x4x256xf32> to vector<4x256xf32>
    %cst_30 = arith.constant dense<0.000000e+00> : vector<4xf32>
    %61 = vector.multi_reduction <add>, %60, %cst_30 [1] : vector<4x256xf32> to vector<4xf32>
    %62 = vector.shape_cast %61 : vector<4xf32> to vector<4x1xf32>
    %cst_31 = arith.constant 2.560000e+02 : f32
    %63 = vector.broadcast %cst_31 : f32 to vector<4x1xf32>
    %64 = arith.divf %62, %63 : vector<4x1xf32>
    %65 = vector.broadcast %64 : vector<4x1xf32> to vector<4x256xf32>
    %66 = arith.subf %60, %65 : vector<4x256xf32>
    %67 = arith.mulf %66, %66 : vector<4x256xf32>
    %cst_32 = arith.constant dense<0.000000e+00> : vector<4xf32>
    %68 = vector.multi_reduction <add>, %67, %cst_32 [1] : vector<4x256xf32> to vector<4xf32>
    %69 = vector.shape_cast %68 : vector<4xf32> to vector<4x1xf32>
    %cst_33 = arith.constant 2.560000e+02 : f32
    %70 = vector.broadcast %cst_33 : f32 to vector<4x1xf32>
    %71 = arith.divf %69, %70 : vector<4x1xf32>
    %72 = vector.broadcast %64 : vector<4x1xf32> to vector<4x256xf32>
    %73 = arith.subf %60, %72 : vector<4x256xf32>
    %cst_34 = arith.constant 9.99999974E-6 : f32
    %74 = vector.broadcast %cst_34 : f32 to vector<4x1xf32>
    %75 = arith.addf %71, %74 : vector<4x1xf32>
    %76 = math.rsqrt %75 : vector<4x1xf32>
    %77 = vector.broadcast %76 : vector<4x1xf32> to vector<4x256xf32>
    %78 = arith.mulf %73, %77 : vector<4x256xf32>
    %79 = vector.broadcast %0 : vector<4x1xf32> to vector<4x256xf32>
    %80 = arith.mulf %78, %79 : vector<4x256xf32>
    %81 = vector.broadcast %1 : vector<4x1xf32> to vector<4x256xf32>
    %82 = arith.addf %80, %81 : vector<4x256xf32>
    %cst_35 = arith.constant dense<0.000000e+00> : vector<24x256xf32>
    %83 = tpu.matmul %2, %82, %cst_35 {dimension_numbers = #tpu.dot_dimension_numbers<[1], [0], [0], [1], [0, 0, 1, 1], [], []>} : vector<24x4xf32>, vector<4x256xf32>, vector<24x256xf32> -> vector<24x256xf32>
    %84 = vector.broadcast %3 : vector<24x1xf32> to vector<24x256xf32>
    %85 = arith.addf %83, %84 : vector<24x256xf32>
    %86 = vector.extract_strided_slice %85 {offsets = [0, 0], sizes = [8, 256], strides = [1, 1]} : vector<24x256xf32> to vector<8x256xf32>
    %87 = vector.extract_strided_slice %85 {offsets = [8, 0], sizes = [8, 256], strides = [1, 1]} : vector<24x256xf32> to vector<8x256xf32>
    %88 = vector.extract_strided_slice %85 {offsets = [16, 0], sizes = [8, 256], strides = [1, 1]} : vector<24x256xf32> to vector<8x256xf32>
    %89 = tpu.transpose %86, [1, 0] : vector<8x256xf32> -> vector<256x8xf32>
    %cst_36 = arith.constant dense<0.000000e+00> : vector<256x256xf32>
    %90 = tpu.matmul %89, %87, %cst_36 {dimension_numbers = #tpu.dot_dimension_numbers<[1], [0], [0], [1], [0, 0, 1, 1], [], []>} : vector<256x8xf32>, vector<8x256xf32>, vector<256x256xf32> -> vector<256x256xf32>
    %cst_37 = arith.constant dense<0xFF800000> : vector<256xf32>
    %91 = vector.multi_reduction <maximumf>, %90, %cst_37 [1] : vector<256x256xf32> to vector<256xf32>
    %92 = vector.shape_cast %91 : vector<256xf32> to vector<256x1xf32>
    %93 = vector.broadcast %92 : vector<256x1xf32> to vector<256x256xf32>
    %94 = arith.subf %90, %93 : vector<256x256xf32>
    %95 = math.exp %94 : vector<256x256xf32>
    %cst_38 = arith.constant dense<0.000000e+00> : vector<256xf32>
    %96 = vector.multi_reduction <add>, %95, %cst_38 [1] : vector<256x256xf32> to vector<256xf32>
    %97 = vector.shape_cast %96 : vector<256xf32> to vector<256x1xf32>
    %98 = tpu.reciprocal %97 {approx = true} : vector<256x1xf32> -> vector<256x1xf32>
    %99 = arith.mulf %97, %98 : vector<256x1xf32>
    %cst_39 = arith.constant 2.000000e+00 : f32
    %100 = vector.broadcast %cst_39 : f32 to vector<256x1xf32>
    %101 = arith.subf %100, %99 : vector<256x1xf32>
    %102 = arith.mulf %98, %101 : vector<256x1xf32>
    %103 = vector.broadcast %102 : vector<256x1xf32> to vector<256x256xf32>
    %104 = arith.mulf %95, %103 : vector<256x256xf32>
    %cst_40 = arith.constant dense<0.000000e+00> : vector<8x256xf32>
    %105 = tpu.matmul %88, %104, %cst_40 {dimension_numbers = #tpu.dot_dimension_numbers<[1], [1], [0], [0], [0, 0, 1, 0], [], []>} : vector<8x256xf32>, vector<256x256xf32>, vector<8x256xf32> -> vector<8x256xf32>
    %cst_41 = arith.constant dense<0.000000e+00> : vector<8x256xf32>
    %106 = tpu.matmul %4, %105, %cst_41 {dimension_numbers = #tpu.dot_dimension_numbers<[1], [0], [0], [1], [0, 0, 1, 1], [], []>} : vector<8x8xf32>, vector<8x256xf32>, vector<8x256xf32> -> vector<8x256xf32>
    %107 = vector.broadcast %5 : vector<8x1xf32> to vector<8x256xf32>
    %108 = arith.addf %106, %107 : vector<8x256xf32>
    %c1_42 = arith.constant 1 : index
    %c0_43 = arith.constant 0 : index
    %c0_44 = arith.constant 0 : index
    %109 = vector.load %arg8[%c1_42, %c0_43, %c0_44] : memref<2x8x256xf32, #tpu.memory_space<vmem>>, vector<1x8x256xf32>
    %110 = vector.shape_cast %109 : vector<1x8x256xf32> to vector<8x256xf32>
    %111 = vector.shape_cast %108 : vector<8x256xf32> to vector<1x8x256xf32>
    tpu.vector_store %arg8[%c1_42, %c0_43, %c0_44], %111 {strides = array<i32>} : memref<2x8x256xf32, #tpu.memory_space<vmem>>, vector<1x8x256xf32>,
    return
  }
  func.func @transform_0(%arg0: i32) -> (i32, i32, i32) {
    %c0_i32 = arith.constant 0 : i32
    %c0_i32_0 = arith.constant 0 : i32
    %c0_i32_1 = arith.constant 0 : i32
    return %arg0, %c0_i32, %c0_i32_0 : i32, i32, i32
  }
  func.func @transform_1(%arg0: i32) -> (i32, i32) {
    %c0_i32 = arith.constant 0 : i32
    %c0_i32_0 = arith.constant 0 : i32
    %c0_i32_1 = arith.constant 0 : i32
    return %c0_i32, %c0_i32_0 : i32, i32
  }
  func.func @transform_2(%arg0: i32) -> (i32, i32) {
    %c0_i32 = arith.constant 0 : i32
    %c0_i32_0 = arith.constant 0 : i32
    %c0_i32_1 = arith.constant 0 : i32
    return %c0_i32, %c0_i32_0 : i32, i32
  }
  func.func @transform_3(%arg0: i32) -> (i32, i32) {
    %c0_i32 = arith.constant 0 : i32
    %c0_i32_0 = arith.constant 0 : i32
    %c0_i32_1 = arith.constant 0 : i32
    return %c0_i32, %c0_i32_0 : i32, i32
  }
  func.func @transform_4(%arg0: i32) -> (i32, i32) {
    %c0_i32 = arith.constant 0 : i32
    %c0_i32_0 = arith.constant 0 : i32
    %c0_i32_1 = arith.constant 0 : i32
    return %c0_i32, %c0_i32_0 : i32, i32
  }
  func.func @transform_5(%arg0: i32) -> (i32, i32) {
    %c0_i32 = arith.constant 0 : i32
    %c0_i32_0 = arith.constant 0 : i32
    %c0_i32_1 = arith.constant 0 : i32
    return %c0_i32, %c0_i32_0 : i32, i32
  }
  func.func @transform_6(%arg0: i32) -> (i32, i32) {
    %c0_i32 = arith.constant 0 : i32
    %c0_i32_0 = arith.constant 0 : i32
    %c0_i32_1 = arith.constant 0 : i32
    return %c0_i32, %c0_i32_0 : i32, i32
  }
  func.func @transform_7(%arg0: i32) -> (i32, i32, i32) {
    %c0_i32 = arith.constant 0 : i32
    %c0_i32_0 = arith.constant 0 : i32
    %c0_i32_1 = arith.constant 0 : i32
    return %arg0, %c0_i32, %c0_i32_0 : i32, i32, i32
  }
}

</mosaic_0001>

<llo_original>
// kernel: attention_head_forward.1
$region0: #{attention_head_forward.1}
  #allocation0 [shape = 'u32[]', space=smem, size = 0x4, offset = 0x4, fixed_abs, tag = 'smem constant byte address 0x4 - core index']
  #allocation1 [shape = 'u32[144,128]{1,0:T(1,128)}', space=vmem, size = 0x12000, scoped, tag = 'internal scratch']
  %s0 = inlined_call_operand.vmem [shape: f32[2,4,256], index: 0, kind: input, shape index: {}]
  %s1 = inlined_call_operand.vmem [shape: f32[4,1], index: 1, kind: input, shape index: {}]
  %s2 = inlined_call_operand.vmem [shape: f32[4,1], index: 2, kind: input, shape index: {}]
  %s3 = inlined_call_operand.vmem [shape: f32[24,4], index: 3, kind: input, shape index: {}]
  %s4 = inlined_call_operand.vmem [shape: f32[24,1], index: 4, kind: input, shape index: {}]
  %s5 = inlined_call_operand.vmem [shape: f32[8,8], index: 5, kind: input, shape index: {}]
  %s6 = inlined_call_operand.vmem [shape: f32[8,1], index: 6, kind: input, shape index: {}]
  %s7 = inlined_call_operand.vmem [shape: f32[2,8,256], index: 7, kind: output, shape index: {}]
  %s8 = sld [smem:[#allocation0]]
  $region38: #{attention_head_forward.1} parent=0
    _
  %s10 = ssub.s32 1, %s8
  %s11 = scalar_select 0, %s10, %s8
  // Predicated region
  $region2: #{attention_head_forward.1} parent=0 // pred_check
    _
  $region3: #{attention_head_forward.1} parent=0 // pred_check_branch
    %13 = sbr.rel (0) target = $region5
  $region4: #{attention_head_forward.1} parent=0 // pred_region
    _
  $region5: #{attention_head_forward.1} parent=0 // pred_fallthru
    _
  // Predicated region
  $region6: #{attention_head_forward.1} parent=0 // pred_check
    _
  $region7: #{attention_head_forward.1} parent=0 // pred_check_branch
    %15 = sbr.rel (0) target = $region9
  $region8: #{attention_head_forward.1} parent=0 // pred_region
    _
  $region9: #{attention_head_forward.1} parent=0 // pred_fallthru
    _
  // Predicated region
  $region10: #{attention_head_forward.1} parent=0 // pred_check
    _
  $region11: #{attention_head_forward.1} parent=0 // pred_check_branch
    %17 = sbr.rel (0) target = $region13
  $region12: #{attention_head_forward.1} parent=0 // pred_region
    _
  $region13: #{attention_head_forward.1} parent=0 // pred_fallthru
    _
  // Predicated region
  $region14: #{attention_head_forward.1} parent=0 // pred_check
    _
  $region15: #{attention_head_forward.1} parent=0 // pred_check_branch
    %19 = sbr.rel (0) target = $region17
  $region16: #{attention_head_forward.1} parent=0 // pred_region
    _
  $region17: #{attention_head_forward.1} parent=0 // pred_fallthru
    _
  // Predicated region
  $region18: #{attention_head_forward.1} parent=0 // pred_check
    _
  $region19: #{attention_head_forward.1} parent=0 // pred_check_branch
    %21 = sbr.rel (0) target = $region21
  $region20: #{attention_head_forward.1} parent=0 // pred_region
    _
  $region21: #{attention_head_forward.1} parent=0 // pred_fallthru
    _
  // Predicated region
  $region22: #{attention_head_forward.1} parent=0 // pred_check
    _
  $region23: #{attention_head_forward.1} parent=0 // pred_check_branch
    %23 = sbr.rel (0) target = $region25
  $region24: #{attention_head_forward.1} parent=0 // pred_region
    _
  $region25: #{attention_head_forward.1} parent=0 // pred_fallthru
    _
  // Predicated region
  $region26: #{attention_head_forward.1} parent=0 // pred_check
    _
  $region27: #{attention_head_forward.1} parent=0 // pred_check_branch
    %25 = sbr.rel (0) target = $region29
  $region28: #{attention_head_forward.1} parent=0 // pred_region
    _
  $region29: #{attention_head_forward.1} parent=0 // pred_fallthru
    _
  %v26 = vld [vmem:[%s1] sm:$0xf]
  %v27 = vld [vmem:[%s2] sm:$0xf]
  %v28 = vld [vmem:[%s3] sm:$0xff]
  %v29 = vld [vmem:[%s3 + $0x8] sm:$0xff]
  %v30 = vld [vmem:[%s3 + $0x10] sm:$0xff]
  %v31 = vld [vmem:[%s4] sm:$0xff]
  %v32 = vld [vmem:[%s4 + $0x8] sm:$0xff]
  %v33 = vld [vmem:[%s4 + $0x10] sm:$0xff]
  %v34 = vld [vmem:[%s5] sm:$0xff]
  %v35 = vld [vmem:[%s6] sm:$0xff]
  %v36 = vld [vmem:[%s0] sm:$0xff]
  %v38 = vcombine.high %v36, %v36
  %vm40 = vcmask 1043456
  %v41 = vsel %vm40, %v36, 0.0
  %v42 = vsel %vm40, %v38, 0.0
  %v43 = vadd.f32 %v41, %v42
  %44 = vadd.xlane.f32.xlu0 %v43
  %v45 = vpop.xlane.xlu0 %44
  %v46 = vrcp.pop 256.0
  %v47 = vmul.f32 %v45, %v46
  %v50 = vunpack.c.l.s4 839922192
  %v51 = vunpack.c.0.s8 %v50
  %v52 = vlaneseq
  %v53 = vshrl.u32 %v52, 7
  %v54 = vsub.s32 %v51, %v53
  %v55 = vrot.slane %v47, %v54
  %v57 = vsub.f32 %v36, %v55
  %v58 = vmul.f32 %v57, %v57
  %v60 = vcombine.high %v58, %v58
  %v62 = vsel %vm40, %v58, 0.0
  %v63 = vsel %vm40, %v60, 0.0
  %v64 = vadd.f32 %v62, %v63
  %65 = vadd.xlane.f32.xlu0 %v64
  %v66 = vpop.xlane.xlu0 %65
  %v67 = vmul.f32 %v66, %v46
  %v68 = vadd.f32 %v67, 1e-05
  %v69 = vrsqrt.pop %v68
  %v72 = vunpack.c.l.s4 839922192
  %v73 = vunpack.c.0.s8 %v72
  %v74 = vlaneseq
  %v75 = vshrl.u32 %v74, 7
  %v76 = vsub.s32 %v73, %v75
  %v77 = vrot.slane %v69, %v76
  %v79 = vmul.f32 %v57, %v77
  %81 = vset.pattern.permute.xlu0 0
  %82 = vperm.xlu0 %81, %v26
  %v83 = vpop.permute.xlu0 %82
  %v85 = vunpack.c.l.s4 839922192
  %v86 = vunpack.c.0.s8 %v85
  %v87 = vlaneseq
  %v88 = vshrl.u32 %v87, 7
  %v89 = vsub.s32 %v86, %v88
  %v90 = vrot.slane %v83, %v89
  %v92 = vmul.f32 %v79, %v90
  %94 = vset.pattern.permute.xlu0 0
  %95 = vperm.xlu0 %94, %v27
  %v96 = vpop.permute.xlu0 %95
  %v98 = vunpack.c.l.s4 839922192
  %v99 = vunpack.c.0.s8 %v98
  %v100 = vlaneseq
  %v101 = vshrl.u32 %v100, 7
  %v102 = vsub.s32 %v99, %v101
  %v103 = vrot.slane %v96, %v102
  %v105 = vadd.f32 %v92, %v103
  %107 = vset.pattern.permute.xlu0 0
  %108 = vperm.xlu0 %107, %v31
  %v109 = vpop.permute.xlu0 %108
  %112 = vset.pattern.permute.xlu0 0
  %113 = vperm.xlu0 %112, %v32
  %v114 = vpop.permute.xlu0 %113
  %117 = vset.pattern.permute.xlu0 0
  %118 = vperm.xlu0 %117, %v33
  %v119 = vpop.permute.xlu0 %118
  %v122 = vcombine.high %v105, %v105
  %vm123 = vcmask 31744
  %v125 = vsel %vm123, %v28, 0
  %v128 = vsel %vm123, %v29, 0
  %v131 = vsel %vm123, %v30, 0
  %v133 = vsel %vm40, %v105, 0
  %v135 = vsel %vm40, %v122, 0
  %137 = vmatprep.subr.mxu0 %v135
  %138 = vmatpush1.msra.mxu0 %v133
  %139 = vmatprep.subr.mxu0 0.0
  %140 = vmatpush1.msra.mxu0 0.0
  %141 = vmatprep.subr.mxu0 0.0
  %142 = vmatpush1.msra.mxu0 0.0
  %143 = vmatprep.subr.mxu0 0.0
  %144 = vmatpush1.msra.mxu0 0.0
  %145 = vmatprep.subr.mxu0 0.0
  %146 = vmatpush1.msra.mxu0 0.0
  %147 = vmatprep.subr.mxu0 0.0
  %148 = vmatpush1.msra.mxu0 0.0
  %149 = vmatprep.subr.mxu0 0.0
  %150 = vmatpush1.msra.mxu0 0.0
  %151 = vmatprep.subr.mxu0 0.0
  %152 = vmatpush1.msra.mxu0 0.0
  %153 = vmatprep.subr.mxu0 0.0
  %154 = vmatpush1.msra.mxu0 0.0
  %155 = vmatprep.subr.mxu0 0.0
  %156 = vmatpush1.msra.mxu0 0.0
  %157 = vmatprep.subr.mxu0 0.0
  %158 = vmatpush1.msra.mxu0 0.0
  %159 = vmatprep.subr.mxu0 0.0
  %160 = vmatpush1.msra.mxu0 0.0
  %161 = vmatprep.subr.mxu0 0.0
  %162 = vmatpush1.msra.mxu0 0.0
  %163 = vmatprep.subr.mxu0 0.0
  %164 = vmatpush1.msra.mxu0 0.0
  %165 = vmatprep.subr.mxu0 0.0
  %166 = vmatpush1.msra.mxu0 0.0
  %167 = vmatprep.subr.mxu0 0.0
  %168 = vmatpush1.msra.mxu0 0.0
  %169 = vmatprep.subr.mxu0 0.0
  %170 = vmatpush1.msra.mxu0 0.0
  %171 = vmatprep.subr.mxu0 0.0
  %172 = vmatpush1.msra.mxu0 0.0
  %173 = vmatprep.subr.mxu0 0.0
  %174 = vmatpush1.msra.mxu0 0.0
  %175 = vmatprep.subr.mxu0 0.0
  %176 = vmatpush1.msra.mxu0 0.0
  %177 = vmatprep.subr.mxu0 0.0
  %178 = vmatpush1.msra.mxu0 0.0
  %179 = vmatprep.subr.mxu0 0.0
  %180 = vmatpush1.msra.mxu0 0.0
  %181 = vmatprep.subr.mxu0 0.0
  %182 = vmatpush1.msra.mxu0 0.0
  %183 = vmatprep.subr.mxu0 0.0
  %184 = vmatpush1.msra.mxu0 0.0
  %185 = vmatprep.subr.mxu0 0.0
  %186 = vmatpush1.msra.mxu0 0.0
  %187 = vmatprep.subr.mxu0 0.0
  %188 = vmatpush1.msra.mxu0 0.0
  %189 = vmatprep.subr.mxu0 0.0
  %190 = vmatpush1.msra.mxu0 0.0
  %191 = vmatprep.subr.mxu0 0.0
  %192 = vmatpush1.msra.mxu0 0.0
  %193 = vmatprep.subr.mxu0 0.0
  %194 = vmatpush1.msra.mxu0 0.0
  %195 = vmatprep.subr.mxu0 0.0
  %196 = vmatpush1.msra.mxu0 0.0
  %197 = vmatprep.subr.mxu0 0.0
  %198 = vmatpush1.msra.mxu0 0.0
  %199 = vmatprep.subr.mxu0 0.0
  %200 = vmatpush1.msra.mxu0 0.0
  %201 = vmatprep.mubr.f32.mxu0 0.0
  %202 = vmatmul.mubr.f32.gmra.mrb[0].mxu0 %v125
  %v203 = vpop.f32.mrb[0].mxu0
  %v204 = vadd.f32 %v109, %v203
  %v205 = vpop.f32.mrb[0].mxu0
  %v206 = vadd.f32 %v109, %v205
  %207 = vmatprep.mubr.f32.mxu0 0.0
  %208 = vmatmul.mubr.f32.gmra.mrb[0].mxu0 %v128
  %v209 = vpop.f32.mrb[0].mxu0
  %v210 = vadd.f32 %v114, %v209
  %v211 = vpop.f32.mrb[0].mxu0
  %v212 = vadd.f32 %v114, %v211
  %213 = vmatprep.mubr.f32.mxu0 0.0
  %214 = vmatmul.mubr.f32.gmra.mrb[0].mxu0 %v131
  %v215 = vpop.f32.mrb[0].mxu0
  %v216 = vadd.f32 %v119, %v215
  %v217 = vpop.f32.mrb[0].mxu0
  %v218 = vadd.f32 %v119, %v217
  %219 = vdwg.mxu0
  %220 = vxpose.xlu0.b32.start [1/16] %v204, 128
  %221 = vxpose.xlu0.b32.cont [2/16] 0.0, 128
  %222 = vxpose.xlu0.b32.cont [3/16] 0.0, 128
  %223 = vxpose.xlu0.b32.cont [4/16] 0.0, 128
  %224 = vxpose.xlu0.b32.cont [5/16] 0.0, 128
  %225 = vxpose.xlu0.b32.cont [6/16] 0.0, 128
  %226 = vxpose.xlu0.b32.cont [7/16] 0.0, 128
  %227 = vxpose.xlu0.b32.cont [8/16] 0.0, 128
  %228 = vxpose.xlu0.b32.cont [9/16] 0.0, 128
  %229 = vxpose.xlu0.b32.cont [10/16] 0.0, 128
  %230 = vxpose.xlu0.b32.cont [11/16] 0.0, 128
  %231 = vxpose.xlu0.b32.cont [12/16] 0.0, 128
  %232 = vxpose.xlu0.b32.cont [13/16] 0.0, 128
  %233 = vxpose.xlu0.b32.cont [14/16] 0.0, 128
  %234 = vxpose.xlu0.b32.cont [15/16] 0.0, 128
  %235 = vxpose.xlu0.b32.end [16/16] 0.0, 128
  %v236 = vpop.trf.xlu0
  %v237 = vpop.trf.xlu0
  %v238 = vpop.trf.xlu0
  %v239 = vpop.trf.xlu0
  %v240 = vpop.trf.xlu0
  %v241 = vpop.trf.xlu0
  %v242 = vpop.trf.xlu0
  %v243 = vpop.trf.xlu0
  %v244 = vpop.trf.xlu0
  %v245 = vpop.trf.xlu0
  %v246 = vpop.trf.xlu0
  %v247 = vpop.trf.xlu0
  %v248 = vpop.trf.xlu0
  %v249 = vpop.trf.xlu0
  %v250 = vpop.trf.xlu0
  %v251 = vpop.trf.xlu0
  %252 = vxpose.xlu0.b32.start [1/16] %v206, 128
  %253 = vxpose.xlu0.b32.cont [2/16] 0.0, 128
  %254 = vxpose.xlu0.b32.cont [3/16] 0.0, 128
  %255 = vxpose.xlu0.b32.cont [4/16] 0.0, 128
  %256 = vxpose.xlu0.b32.cont [5/16] 0.0, 128
  %257 = vxpose.xlu0.b32.cont [6/16] 0.0, 128
  %258 = vxpose.xlu0.b32.cont [7/16] 0.0, 128
  %259 = vxpose.xlu0.b32.cont [8/16] 0.0, 128
  %260 = vxpose.xlu0.b32.cont [9/16] 0.0, 128
  %261 = vxpose.xlu0.b32.cont [10/16] 0.0, 128
  %262 = vxpose.xlu0.b32.cont [11/16] 0.0, 128
  %263 = vxpose.xlu0.b32.cont [12/16] 0.0, 128
  %264 = vxpose.xlu0.b32.cont [13/16] 0.0, 128
  %265 = vxpose.xlu0.b32.cont [14/16] 0.0, 128
  %266 = vxpose.xlu0.b32.cont [15/16] 0.0, 128
  %267 = vxpose.xlu0.b32.end [16/16] 0.0, 128
  %v268 = vpop.trf.xlu0
  %v269 = vpop.trf.xlu0
  %v270 = vpop.trf.xlu0
  %v271 = vpop.trf.xlu0
  %v272 = vpop.trf.xlu0
  %v273 = vpop.trf.xlu0
  %v274 = vpop.trf.xlu0
  %v275 = vpop.trf.xlu0
  %v276 = vpop.trf.xlu0
  %v277 = vpop.trf.xlu0
  %v278 = vpop.trf.xlu0
  %v279 = vpop.trf.xlu0
  %v280 = vpop.trf.xlu0
  %v281 = vpop.trf.xlu0
  %v282 = vpop.trf.xlu0
  %v283 = vpop.trf.xlu0
  %vm284 = vcmask 64512
  %v286 = vsel %vm284, %v236, 0
  %v289 = vsel %vm284, %v237, 0
  %v292 = vsel %vm284, %v238, 0
  %v295 = vsel %vm284, %v239, 0
  %v298 = vsel %vm284, %v240, 0
  %v301 = vsel %vm284, %v241, 0
  %v304 = vsel %vm284, %v242, 0
  %v307 = vsel %vm284, %v243, 0
  %v310 = vsel %vm284, %v244, 0
  %v313 = vsel %vm284, %v245, 0
  %v316 = vsel %vm284, %v246, 0
  %v319 = vsel %vm284, %v247, 0
  %v322 = vsel %vm284, %v248, 0
  %v325 = vsel %vm284, %v249, 0
  %v328 = vsel %vm284, %v250, 0
  %v331 = vsel %vm284, %v251, 0
  %v334 = vsel %vm284, %v268, 0
  %v337 = vsel %vm284, %v269, 0
  %v340 = vsel %vm284, %v270, 0
  %v343 = vsel %vm284, %v271, 0
  %v346 = vsel %vm284, %v272, 0
  %v349 = vsel %vm284, %v273, 0
  %v352 = vsel %vm284, %v274, 0
  %v355 = vsel %vm284, %v275, 0
  %v358 = vsel %vm284, %v276, 0
  %v361 = vsel %vm284, %v277, 0
  %v364 = vsel %vm284, %v278, 0
  %v367 = vsel %vm284, %v279, 0
  %v370 = vsel %vm284, %v280, 0
  %v373 = vsel %vm284, %v281, 0
  %v376 = vsel %vm284, %v282, 0
  %v379 = vsel %vm284, %v283, 0
  %381 = vmatprep.subr.mxu0 %v212
  %382 = vmatpush1.msra.mxu0 %v210
  %383 = vmatprep.subr.mxu0 0.0
  %384 = vmatpush1.msra.mxu0 0.0
  %385 = vmatprep.subr.mxu0 0.0
  %386 = vmatpush1.msra.mxu0 0.0
  %387 = vmatprep.subr.mxu0 0.0
  %388 = vmatpush1.msra.mxu0 0.0
  %389 = vmatprep.subr.mxu0 0.0
  %390 = vmatpush1.msra.mxu0 0.0
  %391 = vmatprep.subr.mxu0 0.0
  %392 = vmatpush1.msra.mxu0 0.0
  %393 = vmatprep.subr.mxu0 0.0
  %394 = vmatpush1.msra.mxu0 0.0
  %395 = vmatprep.subr.mxu0 0.0
  %396 = vmatpush1.msra.mxu0 0.0
  %397 = vmatprep.subr.mxu0 0.0
  %398 = vmatpush1.msra.mxu0 0.0
  %399 = vmatprep.subr.mxu0 0.0
  %400 = vmatpush1.msra.mxu0 0.0
  %401 = vmatprep.subr.mxu0 0.0
  %402 = vmatpush1.msra.mxu0 0.0
  %403 = vmatprep.subr.mxu0 0.0
  %404 = vmatpush1.msra.mxu0 0.0
  %405 = vmatprep.subr.mxu0 0.0
  %406 = vmatpush1.msra.mxu0 0.0
  %407 = vmatprep.subr.mxu0 0.0
  %408 = vmatpush1.msra.mxu0 0.0
  %409 = vmatprep.subr.mxu0 0.0
  %410 = vmatpush1.msra.mxu0 0.0
  %411 = vmatprep.subr.mxu0 0.0
  %412 = vmatpush1.msra.mxu0 0.0
  %413 = vmatprep.subr.mxu0 0.0
  %414 = vmatpush1.msra.mxu0 0.0
  %415 = vmatprep.subr.mxu0 0.0
  %416 = vmatpush1.msra.mxu0 0.0
  %417 = vmatprep.subr.mxu0 0.0
  %418 = vmatpush1.msra.mxu0 0.0
  %419 = vmatprep.subr.mxu0 0.0
  %420 = vmatpush1.msra.mxu0 0.0
  %421 = vmatprep.subr.mxu0 0.0
  %422 = vmatpush1.msra.mxu0 0.0
  %423 = vmatprep.subr.mxu0 0.0
  %424 = vmatpush1.msra.mxu0 0.0
  %425 = vmatprep.subr.mxu0 0.0
  %426 = vmatpush1.msra.mxu0 0.0
  %427 = vmatprep.subr.mxu0 0.0
  %428 = vmatpush1.msra.mxu0 0.0
  %429 = vmatprep.subr.mxu0 0.0
  %430 = vmatpush1.msra.mxu0 0.0
  %431 = vmatprep.subr.mxu0 0.0
  %432 = vmatpush1.msra.mxu0 0.0
  %433 = vmatprep.subr.mxu0 0.0
  %434 = vmatpush1.msra.mxu0 0.0
  %435 = vmatprep.subr.mxu0 0.0
  %436 = vmatpush1.msra.mxu0 0.0
  %437 = vmatprep.subr.mxu0 0.0
  %438 = vmatpush1.msra.mxu0 0.0
  %439 = vmatprep.subr.mxu0 0.0
  %440 = vmatpush1.msra.mxu0 0.0
  %441 = vmatprep.subr.mxu0 0.0
  %442 = vmatpush1.msra.mxu0 0.0
  %443 = vmatprep.subr.mxu0 0.0
  %444 = vmatpush1.msra.mxu0 0.0
  %445 = vmatprep.mubr.f32.mxu0 0.0
  %446 = vmatmul.mubr.f32.gmra.mrb[0].mxu0 %v286
  %v447 = vpop.f32.mrb[0].mxu0
  %v448 = vadd.f32 0.0, %v447
  %v449 = vpop.f32.mrb[0].mxu0
  %v450 = vadd.f32 0.0, %v449
  %451 = vmatprep.mubr.f32.mxu0 0.0
  %452 = vmatmul.mubr.f32.gmra.mrb[0].mxu0 %v289
  %v453 = vpop.f32.mrb[0].mxu0
  %v454 = vadd.f32 0.0, %v453
  %v455 = vpop.f32.mrb[0].mxu0
  %v456 = vadd.f32 0.0, %v455
  %457 = vmatprep.mubr.f32.mxu0 0.0
  %458 = vmatmul.mubr.f32.gmra.mrb[0].mxu0 %v292
  %v459 = vpop.f32.mrb[0].mxu0
  %v460 = vadd.f32 0.0, %v459
  %v461 = vpop.f32.mrb[0].mxu0
  %v462 = vadd.f32 0.0, %v461
  %463 = vmatprep.mubr.f32.mxu0 0.0
  %464 = vmatmul.mubr.f32.gmra.mrb[0].mxu0 %v295
  %v465 = vpop.f32.mrb[0].mxu0
  %v466 = vadd.f32 0.0, %v465
  %v467 = vpop.f32.mrb[0].mxu0
  %v468 = vadd.f32 0.0, %v467
  %469 = vmatprep.mubr.f32.mxu0 0.0
  %470 = vmatmul.mubr.f32.gmra.mrb[0].mxu0 %v298
  %v471 = vpop.f32.mrb[0].mxu0
  %v472 = vadd.f32 0.0, %v471
  %v473 = vpop.f32.mrb[0].mxu0
  %v474 = vadd.f32 0.0, %v473
  %475 = vmatprep.mubr.f32.mxu0 0.0
  %476 = vmatmul.mubr.f32.gmra.mrb[0].mxu0 %v301
  %v477 = vpop.f32.mrb[0].mxu0
  %v478 = vadd.f32 0.0, %v477
  %v479 = vpop.f32.mrb[0].mxu0
  %v480 = vadd.f32 0.0, %v479
  %481 = vmatprep.mubr.f32.mxu0 0.0
  %482 = vmatmul.mubr.f32.gmra.mrb[0].mxu0 %v304
  %v483 = vpop.f32.mrb[0].mxu0
  %v484 = vadd.f32 0.0, %v483
  %v485 = vpop.f32.mrb[0].mxu0
  %v486 = vadd.f32 0.0, %v485
  %487 = vmatprep.mubr.f32.mxu0 0.0
  %488 = vmatmul.mubr.f32.gmra.mrb[0].mxu0 %v307
  %v489 = vpop.f32.mrb[0].mxu0
  %v490 = vadd.f32 0.0, %v489
  %v491 = vpop.f32.mrb[0].mxu0
  %v492 = vadd.f32 0.0, %v491
  %493 = vmatprep.mubr.f32.mxu0 0.0
  %494 = vmatmul.mubr.f32.gmra.mrb[0].mxu0 %v310
  %v495 = vpop.f32.mrb[0].mxu0
  %v496 = vadd.f32 0.0, %v495
  %v497 = vpop.f32.mrb[0].mxu0
  %v498 = vadd.f32 0.0, %v497
  %499 = vmatprep.mubr.f32.mxu0 0.0
  %500 = vmatmul.mubr.f32.gmra.mrb[0].mxu0 %v313
  %v501 = vpop.f32.mrb[0].mxu0
  %v502 = vadd.f32 0.0, %v501
  %v503 = vpop.f32.mrb[0].mxu0
  %v504 = vadd.f32 0.0, %v503
  %505 = vmatprep.mubr.f32.mxu0 0.0
  %506 = vmatmul.mubr.f32.gmra.mrb[0].mxu0 %v316
  %v507 = vpop.f32.mrb[0].mxu0
  %v508 = vadd.f32 0.0, %v507
  %v509 = vpop.f32.mrb[0].mxu0
  %v510 = vadd.f32 0.0, %v509
  %511 = vmatprep.mubr.f32.mxu0 0.0
  %512 = vmatmul.mubr.f32.gmra.mrb[0].mxu0 %v319
  %v513 = vpop.f32.mrb[0].mxu0
  %v514 = vadd.f32 0.0, %v513
  %v515 = vpop.f32.mrb[0].mxu0
  %v516 = vadd.f32 0.0, %v515
  %517 = vmatprep.mubr.f32.mxu0 0.0
  %518 = vmatmul.mubr.f32.gmra.mrb[0].mxu0 %v322
  %v519 = vpop.f32.mrb[0].mxu0
  %v520 = vadd.f32 0.0, %v519
  %v521 = vpop.f32.mrb[0].mxu0
  %v522 = vadd.f32 0.0, %v521
  %523 = vmatprep.mubr.f32.mxu0 0.0
  %524 = vmatmul.mubr.f32.gmra.mrb[0].mxu0 %v325
  %v525 = vpop.f32.mrb[0].mxu0
  %v526 = vadd.f32 0.0, %v525
  %v527 = vpop.f32.mrb[0].mxu0
  %v528 = vadd.f32 0.0, %v527
  %529 = vmatprep.mubr.f32.mxu0 0.0
  %530 = vmatmul.mubr.f32.gmra.mrb[0].mxu0 %v328
  %v531 = vpop.f32.mrb[0].mxu0
  %v532 = vadd.f32 0.0, %v531
  %v533 = vpop.f32.mrb[0].mxu0
  %v534 = vadd.f32 0.0, %v533
  %535 = vmatprep.mubr.f32.mxu0 0.0
  %536 = vmatmul.mubr.f32.gmra.mrb[0].mxu0 %v331
  %v537 = vpop.f32.mrb[0].mxu0
  %v538 = vadd.f32 0.0, %v537
  %v539 = vpop.f32.mrb[0].mxu0
  %v540 = vadd.f32 0.0, %v539
  %541 = vmatprep.mubr.f32.mxu0 0.0
  %542 = vmatmul.mubr.f32.gmra.mrb[0].mxu0 %v334
  %v543 = vpop.f32.mrb[0].mxu0
  %v544 = vadd.f32 0.0, %v543
  %v545 = vpop.f32.mrb[0].mxu0
  %v546 = vadd.f32 0.0, %v545
  %547 = vmatprep.mubr.f32.mxu0 0.0
  %548 = vmatmul.mubr.f32.gmra.mrb[0].mxu0 %v337
  %v549 = vpop.f32.mrb[0].mxu0
  %v550 = vadd.f32 0.0, %v549
  %v551 = vpop.f32.mrb[0].mxu0
  %v552 = vadd.f32 0.0, %v551
  %553 = vmatprep.mubr.f32.mxu0 0.0
  %554 = vmatmul.mubr.f32.gmra.mrb[0].mxu0 %v340
  %v555 = vpop.f32.mrb[0].mxu0
  %v556 = vadd.f32 0.0, %v555
  %v557 = vpop.f32.mrb[0].mxu0
  %v558 = vadd.f32 0.0, %v557
  %559 = vmatprep.mubr.f32.mxu0 0.0
  %560 = vmatmul.mubr.f32.gmra.mrb[0].mxu0 %v343
  %v561 = vpop.f32.mrb[0].mxu0
  %v562 = vadd.f32 0.0, %v561
  %v563 = vpop.f32.mrb[0].mxu0
  %v564 = vadd.f32 0.0, %v563
  %565 = vmatprep.mubr.f32.mxu0 0.0
  %566 = vmatmul.mubr.f32.gmra.mrb[0].mxu0 %v346
  %v567 = vpop.f32.mrb[0].mxu0
  %v568 = vadd.f32 0.0, %v567
  %v569 = vpop.f32.mrb[0].mxu0
  %v570 = vadd.f32 0.0, %v569
  %571 = vmatprep.mubr.f32.mxu0 0.0
  %572 = vmatmul.mubr.f32.gmra.mrb[0].mxu0 %v349
  %v573 = vpop.f32.mrb[0].mxu0
  %v574 = vadd.f32 0.0, %v573
  %v575 = vpop.f32.mrb[0].mxu0
  %v576 = vadd.f32 0.0, %v575
  %577 = vmatprep.mubr.f32.mxu0 0.0
  %578 = vmatmul.mubr.f32.gmra.mrb[0].mxu0 %v352
  %v579 = vpop.f32.mrb[0].mxu0
  %v580 = vadd.f32 0.0, %v579
  %v581 = vpop.f32.mrb[0].mxu0
  %v582 = vadd.f32 0.0, %v581
  %583 = vmatprep.mubr.f32.mxu0 0.0
  %584 = vmatmul.mubr.f32.gmra.mrb[0].mxu0 %v355
  %v585 = vpop.f32.mrb[0].mxu0
  %v586 = vadd.f32 0.0, %v585
  %v587 = vpop.f32.mrb[0].mxu0
  %v588 = vadd.f32 0.0, %v587
  %589 = vmatprep.mubr.f32.mxu0 0.0
  %590 = vmatmul.mubr.f32.gmra.mrb[0].mxu0 %v358
  %v591 = vpop.f32.mrb[0].mxu0
  %v592 = vadd.f32 0.0, %v591
  %v593 = vpop.f32.mrb[0].mxu0
  %v594 = vadd.f32 0.0, %v593
  %595 = vmatprep.mubr.f32.mxu0 0.0
  %596 = vmatmul.mubr.f32.gmra.mrb[0].mxu0 %v361
  %v597 = vpop.f32.mrb[0].mxu0
  %v598 = vadd.f32 0.0, %v597
  %v599 = vpop.f32.mrb[0].mxu0
  %v600 = vadd.f32 0.0, %v599
  %601 = vmatprep.mubr.f32.mxu0 0.0
  %602 = vmatmul.mubr.f32.gmra.mrb[0].mxu0 %v364
  %v603 = vpop.f32.mrb[0].mxu0
  %v604 = vadd.f32 0.0, %v603
  %v605 = vpop.f32.mrb[0].mxu0
  %v606 = vadd.f32 0.0, %v605
  %607 = vmatprep.mubr.f32.mxu0 0.0
  %608 = vmatmul.mubr.f32.gmra.mrb[0].mxu0 %v367
  %v609 = vpop.f32.mrb[0].mxu0
  %v610 = vadd.f32 0.0, %v609
  %v611 = vpop.f32.mrb[0].mxu0
  %v612 = vadd.f32 0.0, %v611
  %613 = vmatprep.mubr.f32.mxu0 0.0
  %614 = vmatmul.mubr.f32.gmra.mrb[0].mxu0 %v370
  %v615 = vpop.f32.mrb[0].mxu0
  %v616 = vadd.f32 0.0, %v615
  %v617 = vpop.f32.mrb[0].mxu0
  %v618 = vadd.f32 0.0, %v617
  %619 = vmatprep.mubr.f32.mxu0 0.0
  %620 = vmatmul.mubr.f32.gmra.mrb[0].mxu0 %v373
  %v621 = vpop.f32.mrb[0].mxu0
  %v622 = vadd.f32 0.0, %v621
  %v623 = vpop.f32.mrb[0].mxu0
  %v624 = vadd.f32 0.0, %v623
  %625 = vmatprep.mubr.f32.mxu0 0.0
  %626 = vmatmul.mubr.f32.gmra.mrb[0].mxu0 %v376
  %v627 = vpop.f32.mrb[0].mxu0
  %v628 = vadd.f32 0.0, %v627
  %v629 = vpop.f32.mrb[0].mxu0
  %v630 = vadd.f32 0.0, %v629
  %631 = vmatprep.mubr.f32.mxu0 0.0
  %632 = vmatmul.mubr.f32.gmra.mrb[0].mxu0 %v379
  %v633 = vpop.f32.mrb[0].mxu0
  %v634 = vadd.f32 0.0, %v633
  %v635 = vpop.f32.mrb[0].mxu0
  %v636 = vadd.f32 0.0, %v635
  %637 = vdwg.mxu0
  %v638 = vmax.f32 %v448, %v450
  %639 = vmax.xlane.f32.xlu0 %v638
  %v640 = vpop.xlane.xlu0 %639
  %v641 = vmax.f32 %v454, %v456
  %642 = vmax.xlane.f32.xlu0 %v641
  %v643 = vpop.xlane.xlu0 %642
  %v644 = vmax.f32 %v460, %v462
  %645 = vmax.xlane.f32.xlu0 %v644
  %v646 = vpop.xlane.xlu0 %645
  %v647 = vmax.f32 %v466, %v468
  %648 = vmax.xlane.f32.xlu0 %v647
  %v649 = vpop.xlane.xlu0 %648
  %v650 = vmax.f32 %v472, %v474
  %651 = vmax.xlane.f32.xlu0 %v650
  %v652 = vpop.xlane.xlu0 %651
  %v653 = vmax.f32 %v478, %v480
  %654 = vmax.xlane.f32.xlu0 %v653
  %v655 = vpop.xlane.xlu0 %654
  %v656 = vmax.f32 %v484, %v486
  %657 = vmax.xlane.f32.xlu0 %v656
  %v658 = vpop.xlane.xlu0 %657
  %v659 = vmax.f32 %v490, %v492
  %660 = vmax.xlane.f32.xlu0 %v659
  %v661 = vpop.xlane.xlu0 %660
  %v662 = vmax.f32 %v496, %v498
  %663 = vmax.xlane.f32.xlu0 %v662
  %v664 = vpop.xlane.xlu0 %663
  %v665 = vmax.f32 %v502, %v504
  %666 = vmax.xlane.f32.xlu0 %v665
  %v667 = vpop.xlane.xlu0 %666
  %v668 = vmax.f32 %v508, %v510
  %669 = vmax.xlane.f32.xlu0 %v668
  %v670 = vpop.xlane.xlu0 %669
  %v671 = vmax.f32 %v514, %v516
  %672 = vmax.xlane.f32.xlu0 %v671
  %v673 = vpop.xlane.xlu0 %672
  %v674 = vmax.f32 %v520, %v522
  %675 = vmax.xlane.f32.xlu0 %v674
  %v676 = vpop.xlane.xlu0 %675
  %v677 = vmax.f32 %v526, %v528
  %678 = vmax.xlane.f32.xlu0 %v677
  %v679 = vpop.xlane.xlu0 %678
  %v680 = vmax.f32 %v532, %v534
  %681 = vmax.xlane.f32.xlu0 %v680
  %v682 = vpop.xlane.xlu0 %681
  %v683 = vmax.f32 %v538, %v540
  %684 = vmax.xlane.f32.xlu0 %v683
  %v685 = vpop.xlane.xlu0 %684
  %v686 = vmax.f32 %v544, %v546
  %687 = vmax.xlane.f32.xlu0 %v686
  %v688 = vpop.xlane.xlu0 %687
  %v689 = vmax.f32 %v550, %v552
  %690 = vmax.xlane.f32.xlu0 %v689
  %v691 = vpop.xlane.xlu0 %690
  %v692 = vmax.f32 %v556, %v558
  %693 = vmax.xlane.f32.xlu0 %v692
  %v694 = vpop.xlane.xlu0 %693
  %v695 = vmax.f32 %v562, %v564
  %696 = vmax.xlane.f32.xlu0 %v695
  %v697 = vpop.xlane.xlu0 %696
  %v698 = vmax.f32 %v568, %v570
  %699 = vmax.xlane.f32.xlu0 %v698
  %v700 = vpop.xlane.xlu0 %699
  %v701 = vmax.f32 %v574, %v576
  %702 = vmax.xlane.f32.xlu0 %v701
  %v703 = vpop.xlane.xlu0 %702
  %v704 = vmax.f32 %v580, %v582
  %705 = vmax.xlane.f32.xlu0 %v704
  %v706 = vpop.xlane.xlu0 %705
  %v707 = vmax.f32 %v586, %v588
  %708 = vmax.xlane.f32.xlu0 %v707
  %v709 = vpop.xlane.xlu0 %708
  %v710 = vmax.f32 %v592, %v594
  %711 = vmax.xlane.f32.xlu0 %v710
  %v712 = vpop.xlane.xlu0 %711
  %v713 = vmax.f32 %v598, %v600
  %714 = vmax.xlane.f32.xlu0 %v713
  %v715 = vpop.xlane.xlu0 %714
  %v716 = vmax.f32 %v604, %v606
  %717 = vmax.xlane.f32.xlu0 %v716
  %v718 = vpop.xlane.xlu0 %717
  %v719 = vmax.f32 %v610, %v612
  %720 = vmax.xlane.f32.xlu0 %v719
  %v721 = vpop.xlane.xlu0 %720
  %v722 = vmax.f32 %v616, %v618
  %723 = vmax.xlane.f32.xlu0 %v722
  %v724 = vpop.xlane.xlu0 %723
  %v725 = vmax.f32 %v622, %v624
  %726 = vmax.xlane.f32.xlu0 %v725
  %v727 = vpop.xlane.xlu0 %726
  %v728 = vmax.f32 %v628, %v630
  %729 = vmax.xlane.f32.xlu0 %v728
  %v730 = vpop.xlane.xlu0 %729
  %v731 = vmax.f32 %v634, %v636
  %732 = vmax.xlane.f32.xlu0 %v731
  %v733 = vpop.xlane.xlu0 %732
  %v734 = vsub.f32 %v448, %v640
  %v735 = vsub.f32 %v450, %v640
  %v736 = vsub.f32 %v454, %v643
  %v737 = vsub.f32 %v456, %v643
  %v738 = vsub.f32 %v460, %v646
  %v739 = vsub.f32 %v462, %v646
  %v740 = vsub.f32 %v466, %v649
  %v741 = vsub.f32 %v468, %v649
  %v742 = vsub.f32 %v472, %v652
  %v743 = vsub.f32 %v474, %v652
  %v744 = vsub.f32 %v478, %v655
  %v745 = vsub.f32 %v480, %v655
  %v746 = vsub.f32 %v484, %v658
  %v747 = vsub.f32 %v486, %v658
  %v748 = vsub.f32 %v490, %v661
  %v749 = vsub.f32 %v492, %v661
  %v750 = vsub.f32 %v496, %v664
  %v751 = vsub.f32 %v498, %v664
  %v752 = vsub.f32 %v502, %v667
  %v753 = vsub.f32 %v504, %v667
  %v754 = vsub.f32 %v508, %v670
  %v755 = vsub.f32 %v510, %v670
  %v756 = vsub.f32 %v514, %v673
  %v757 = vsub.f32 %v516, %v673
  %v758 = vsub.f32 %v520, %v676
  %v759 = vsub.f32 %v522, %v676
  %v760 = vsub.f32 %v526, %v679
  %v761 = vsub.f32 %v528, %v679
  %v762 = vsub.f32 %v532, %v682
  %v763 = vsub.f32 %v534, %v682
  %v764 = vsub.f32 %v538, %v685
  %v765 = vsub.f32 %v540, %v685
  %v766 = vsub.f32 %v544, %v688
  %v767 = vsub.f32 %v546, %v688
  %v768 = vsub.f32 %v550, %v691
  %v769 = vsub.f32 %v552, %v691
  %v770 = vsub.f32 %v556, %v694
  %v771 = vsub.f32 %v558, %v694
  %v772 = vsub.f32 %v562, %v697
  %v773 = vsub.f32 %v564, %v697
  %v774 = vsub.f32 %v568, %v700
  %v775 = vsub.f32 %v570, %v700
  %v776 = vsub.f32 %v574, %v703
  %v777 = vsub.f32 %v576, %v703
  %v778 = vsub.f32 %v580, %v706
  %v779 = vsub.f32 %v582, %v706
  %v780 = vsub.f32 %v586, %v709
  %v781 = vsub.f32 %v588, %v709
  %v782 = vsub.f32 %v592, %v712
  %v783 = vsub.f32 %v594, %v712
  %v784 = vsub.f32 %v598, %v715
  %v785 = vsub.f32 %v600, %v715
  %v786 = vsub.f32 %v604, %v718
  %v787 = vsub.f32 %v606, %v718
  %v788 = vsub.f32 %v610, %v721
  %v789 = vsub.f32 %v612, %v721
  %v790 = vsub.f32 %v616, %v724
  %v791 = vsub.f32 %v618, %v724
  %v792 = vsub.f32 %v622, %v727
  %v793 = vsub.f32 %v624, %v727
  %v794 = vsub.f32 %v628, %v730
  %v795 = vsub.f32 %v630, %v730
  %v796 = vsub.f32 %v634, %v733
  %v797 = vsub.f32 %v636, %v733
  %v798 = vmul.f32 %v734, 1.442695
  %v799 = vpow.pop %v798
  %v800 = vmul.f32 %v735, 1.442695
  %v801 = vpow.pop %v800
  %v802 = vmul.f32 %v736, 1.442695
  %v803 = vpow.pop %v802
  %v804 = vmul.f32 %v737, 1.442695
  %v805 = vpow.pop %v804
  %v806 = vmul.f32 %v738, 1.442695
  %v807 = vpow.pop %v806
  %v808 = vmul.f32 %v739, 1.442695
  %v809 = vpow.pop %v808
  %v810 = vmul.f32 %v740, 1.442695
  %v811 = vpow.pop %v810
  %v812 = vmul.f32 %v741, 1.442695
  %v813 = vpow.pop %v812
  %v814 = vmul.f32 %v742, 1.442695
  %v815 = vpow.pop %v814
  %v816 = vmul.f32 %v743, 1.442695
  %v817 = vpow.pop %v816
  %v818 = vmul.f32 %v744, 1.442695
  %v819 = vpow.pop %v818
  %v820 = vmul.f32 %v745, 1.442695
  %v821 = vpow.pop %v820
  %v822 = vmul.f32 %v746, 1.442695
  %v823 = vpow.pop %v822
  %v824 = vmul.f32 %v747, 1.442695
  %v825 = vpow.pop %v824
  %v826 = vmul.f32 %v748, 1.442695
  %v827 = vpow.pop %v826
  %v828 = vmul.f32 %v749, 1.442695
  %v829 = vpow.pop %v828
  %v830 = vmul.f32 %v750, 1.442695
  %v831 = vpow.pop %v830
  %v832 = vmul.f32 %v751, 1.442695
  %v833 = vpow.pop %v832
  %v834 = vmul.f32 %v752, 1.442695
  %v835 = vpow.pop %v834
  %v836 = vmul.f32 %v753, 1.442695
  %v837 = vpow.pop %v836
  %v838 = vmul.f32 %v754, 1.442695
  %v839 = vpow.pop %v838
  %v840 = vmul.f32 %v755, 1.442695
  %v841 = vpow.pop %v840
  %v842 = vmul.f32 %v756, 1.442695
  %v843 = vpow.pop %v842
  %v844 = vmul.f32 %v757, 1.442695
  %v845 = vpow.pop %v844
  %v846 = vmul.f32 %v758, 1.442695
  %v847 = vpow.pop %v846
  %v848 = vmul.f32 %v759, 1.442695
  %v849 = vpow.pop %v848
  %v850 = vmul.f32 %v760, 1.442695
  %v851 = vpow.pop %v850
  %v852 = vmul.f32 %v761, 1.442695
  %v853 = vpow.pop %v852
  %v854 = vmul.f32 %v762, 1.442695
  %v855 = vpow.pop %v854
  %v856 = vmul.f32 %v763, 1.442695
  %v857 = vpow.pop %v856
  %v858 = vmul.f32 %v764, 1.442695
  %v859 = vpow.pop %v858
  %v860 = vmul.f32 %v765, 1.442695
  %v861 = vpow.pop %v860
  %v862 = vmul.f32 %v766, 1.442695
  %v863 = vpow.pop %v862
  %v864 = vmul.f32 %v767, 1.442695
  %v865 = vpow.pop %v864
  %v866 = vmul.f32 %v768, 1.442695
  %v867 = vpow.pop %v866
  %v868 = vmul.f32 %v769, 1.442695
  %v869 = vpow.pop %v868
  %v870 = vmul.f32 %v770, 1.442695
  %v871 = vpow.pop %v870
  %v872 = vmul.f32 %v771, 1.442695
  %v873 = vpow.pop %v872
  %v874 = vmul.f32 %v772, 1.442695
  %v875 = vpow.pop %v874
  %v876 = vmul.f32 %v773, 1.442695
  %v877 = vpow.pop %v876
  %v878 = vmul.f32 %v774, 1.442695
  %v879 = vpow.pop %v878
  %v880 = vmul.f32 %v775, 1.442695
  %v881 = vpow.pop %v880
  %v882 = vmul.f32 %v776, 1.442695
  %v883 = vpow.pop %v882
  %v884 = vmul.f32 %v777, 1.442695
  %v885 = vpow.pop %v884
  %v886 = vmul.f32 %v778, 1.442695
  %v887 = vpow.pop %v886
  %v888 = vmul.f32 %v779, 1.442695
  %v889 = vpow.pop %v888
  %v890 = vmul.f32 %v780, 1.442695
  %v891 = vpow.pop %v890
  %v892 = vmul.f32 %v781, 1.442695
  %v893 = vpow.pop %v892
  %v894 = vmul.f32 %v782, 1.442695
  %v895 = vpow.pop %v894
  %v896 = vmul.f32 %v783, 1.442695
  %v897 = vpow.pop %v896
  %v898 = vmul.f32 %v784, 1.442695
  %v899 = vpow.pop %v898
  %v900 = vmul.f32 %v785, 1.442695
  %v901 = vpow.pop %v900
  %v902 = vmul.f32 %v786, 1.442695
  %v903 = vpow.pop %v902
  %v904 = vmul.f32 %v787, 1.442695
  %v905 = vpow.pop %v904
  %v906 = vmul.f32 %v788, 1.442695
  %v907 = vpow.pop %v906
  %v908 = vmul.f32 %v789, 1.442695
  %v909 = vpow.pop %v908
  %v910 = vmul.f32 %v790, 1.442695
  %v911 = vpow.pop %v910
  %v912 = vmul.f32 %v791, 1.442695
  %v913 = vpow.pop %v912
  %v914 = vmul.f32 %v792, 1.442695
  %v915 = vpow.pop %v914
  %v916 = vmul.f32 %v793, 1.442695
  %v917 = vpow.pop %v916
  %v918 = vmul.f32 %v794, 1.442695
  %v919 = vpow.pop %v918
  %v920 = vmul.f32 %v795, 1.442695
  %v921 = vpow.pop %v920
  %v922 = vmul.f32 %v796, 1.442695
  %v923 = vpow.pop %v922
  %v924 = vmul.f32 %v797, 1.442695
  %v925 = vpow.pop %v924
  %v926 = vadd.f32 %v799, %v801
  %927 = vadd.xlane.f32.xlu0 %v926
  %v928 = vpop.xlane.xlu0 %927
  %v929 = vadd.f32 %v803, %v805
  %930 = vadd.xlane.f32.xlu0 %v929
  %v931 = vpop.xlane.xlu0 %930
  %v932 = vadd.f32 %v807, %v809
  %933 = vadd.xlane.f32.xlu0 %v932
  %v934 = vpop.xlane.xlu0 %933
  %v935 = vadd.f32 %v811, %v813
  %936 = vadd.xlane.f32.xlu0 %v935
  %v937 = vpop.xlane.xlu0 %936
  %v938 = vadd.f32 %v815, %v817
  %939 = vadd.xlane.f32.xlu0 %v938
  %v940 = vpop.xlane.xlu0 %939
  %v941 = vadd.f32 %v819, %v821
  %942 = vadd.xlane.f32.xlu0 %v941
  %v943 = vpop.xlane.xlu0 %942
  %v944 = vadd.f32 %v823, %v825
  %945 = vadd.xlane.f32.xlu0 %v944
  %v946 = vpop.xlane.xlu0 %945
  %v947 = vadd.f32 %v827, %v829
  %948 = vadd.xlane.f32.xlu0 %v947
  %v949 = vpop.xlane.xlu0 %948
  %v950 = vadd.f32 %v831, %v833
  %951 = vadd.xlane.f32.xlu0 %v950
  %v952 = vpop.xlane.xlu0 %951
  %v953 = vadd.f32 %v835, %v837
  %954 = vadd.xlane.f32.xlu0 %v953
  %v955 = vpop.xlane.xlu0 %954
  %v956 = vadd.f32 %v839, %v841
  %957 = vadd.xlane.f32.xlu0 %v956
  %v958 = vpop.xlane.xlu0 %957
  %v959 = vadd.f32 %v843, %v845
  %960 = vadd.xlane.f32.xlu0 %v959
  %v961 = vpop.xlane.xlu0 %960
  %v962 = vadd.f32 %v847, %v849
  %963 = vadd.xlane.f32.xlu0 %v962
  %v964 = vpop.xlane.xlu0 %963
  %v965 = vadd.f32 %v851, %v853
  %966 = vadd.xlane.f32.xlu0 %v965
  %v967 = vpop.xlane.xlu0 %966
  %v968 = vadd.f32 %v855, %v857
  %969 = vadd.xlane.f32.xlu0 %v968
  %v970 = vpop.xlane.xlu0 %969
  %v971 = vadd.f32 %v859, %v861
  %972 = vadd.xlane.f32.xlu0 %v971
  %v973 = vpop.xlane.xlu0 %972
  %v974 = vadd.f32 %v863, %v865
  %975 = vadd.xlane.f32.xlu0 %v974
  %v976 = vpop.xlane.xlu0 %975
  %v977 = vadd.f32 %v867, %v869
  %978 = vadd.xlane.f32.xlu0 %v977
  %v979 = vpop.xlane.xlu0 %978
  %v980 = vadd.f32 %v871, %v873
  %981 = vadd.xlane.f32.xlu0 %v980
  %v982 = vpop.xlane.xlu0 %981
  %v983 = vadd.f32 %v875, %v877
  %984 = vadd.xlane.f32.xlu0 %v983
  %v985 = vpop.xlane.xlu0 %984
  %v986 = vadd.f32 %v879, %v881
  %987 = vadd.xlane.f32.xlu0 %v986
  %v988 = vpop.xlane.xlu0 %987
  %v989 = vadd.f32 %v883, %v885
  %990 = vadd.xlane.f32.xlu0 %v989
  %v991 = vpop.xlane.xlu0 %990
  %v992 = vadd.f32 %v887, %v889
  %993 = vadd.xlane.f32.xlu0 %v992
  %v994 = vpop.xlane.xlu0 %993
  %v995 = vadd.f32 %v891, %v893
  %996 = vadd.xlane.f32.xlu0 %v995
  %v997 = vpop.xlane.xlu0 %996
  %v998 = vadd.f32 %v895, %v897
  %999 = vadd.xlane.f32.xlu0 %v998
  %v1000 = vpop.xlane.xlu0 %999
  %v1001 = vadd.f32 %v899, %v901
  %1002 = vadd.xlane.f32.xlu0 %v1001
  %v1003 = vpop.xlane.xlu0 %1002
  %v1004 = vadd.f32 %v903, %v905
  %1005 = vadd.xlane.f32.xlu0 %v1004
  %v1006 = vpop.xlane.xlu0 %1005
  %v1007 = vadd.f32 %v907, %v909
  %1008 = vadd.xlane.f32.xlu0 %v1007
  %v1009 = vpop.xlane.xlu0 %1008
  %v1010 = vadd.f32 %v911, %v913
  %1011 = vadd.xlane.f32.xlu0 %v1010
  %v1012 = vpop.xlane.xlu0 %1011
  %v1013 = vadd.f32 %v915, %v917
  %1014 = vadd.xlane.f32.xlu0 %v1013
  %v1015 = vpop.xlane.xlu0 %1014
  %v1016 = vadd.f32 %v919, %v921
  %1017 = vadd.xlane.f32.xlu0 %v1016
  %v1018 = vpop.xlane.xlu0 %1017
  %v1019 = vadd.f32 %v923, %v925
  %1020 = vadd.xlane.f32.xlu0 %v1019
  %v1021 = vpop.xlane.xlu0 %1020
  %v1022 = vrcp.pop %v928
  %v1023 = vrcp.pop %v931
  %v1024 = vrcp.pop %v934
  %v1025 = vrcp.pop %v937
  %v1026 = vrcp.pop %v940
  %v1027 = vrcp.pop %v943
  %v1028 = vrcp.pop %v946
  %v1029 = vrcp.pop %v949
  %v1030 = vrcp.pop %v952
  %v1031 = vrcp.pop %v955
  %v1032 = vrcp.pop %v958
  %v1033 = vrcp.pop %v961
  %v1034 = vrcp.pop %v964
  %v1035 = vrcp.pop %v967
  %v1036 = vrcp.pop %v970
  %v1037 = vrcp.pop %v973
  %v1038 = vrcp.pop %v976
  %v1039 = vrcp.pop %v979
  %v1040 = vrcp.pop %v982
  %v1041 = vrcp.pop %v985
  %v1042 = vrcp.pop %v988
  %v1043 = vrcp.pop %v991
  %v1044 = vrcp.pop %v994
  %v1045 = vrcp.pop %v997
  %v1046 = vrcp.pop %v1000
  %v1047 = vrcp.pop %v1003
  %v1048 = vrcp.pop %v1006
  %v1049 = vrcp.pop %v1009
  %v1050 = vrcp.pop %v1012
  %v1051 = vrcp.pop %v1015
  %v1052 = vrcp.pop %v1018
  %v1053 = vrcp.pop %v1021
  %v1054 = vmul.f32 %v928, %v1022
  %v1055 = vmul.f32 %v931, %v1023
  %v1056 = vmul.f32 %v934, %v1024
  %v1057 = vmul.f32 %v937, %v1025
  %v1058 = vmul.f32 %v940, %v1026
  %v1059 = vmul.f32 %v943, %v1027
  %v1060 = vmul.f32 %v946, %v1028
  %v1061 = vmul.f32 %v949, %v1029
  %v1062 = vmul.f32 %v952, %v1030
  %v1063 = vmul.f32 %v955, %v1031
  %v1064 = vmul.f32 %v958, %v1032
  %v1065 = vmul.f32 %v961, %v1033
  %v1066 = vmul.f32 %v964, %v1034
  %v1067 = vmul.f32 %v967, %v1035
  %v1068 = vmul.f32 %v970, %v1036
  %v1069 = vmul.f32 %v973, %v1037
  %v1070 = vmul.f32 %v976, %v1038
  %v1071 = vmul.f32 %v979, %v1039
  %v1072 = vmul.f32 %v982, %v1040
  %v1073 = vmul.f32 %v985, %v1041
  %v1074 = vmul.f32 %v988, %v1042
  %v1075 = vmul.f32 %v991, %v1043
  %v1076 = vmul.f32 %v994, %v1044
  %v1077 = vmul.f32 %v997, %v1045
  %v1078 = vmul.f32 %v1000, %v1046
  %v1079 = vmul.f32 %v1003, %v1047
  %v1080 = vmul.f32 %v1006, %v1048
  %v1081 = vmul.f32 %v1009, %v1049
  %v1082 = vmul.f32 %v1012, %v1050
  %v1083 = vmul.f32 %v1015, %v1051
  %v1084 = vmul.f32 %v1018, %v1052
  %v1085 = vmul.f32 %v1021, %v1053
  %v1086 = vsub.f32 2.0, %v1054
  %v1087 = vsub.f32 2.0, %v1055
  %v1088 = vsub.f32 2.0, %v1056
  %v1089 = vsub.f32 2.0, %v1057
  %v1090 = vsub.f32 2.0, %v1058
  %v1091 = vsub.f32 2.0, %v1059
  %v1092 = vsub.f32 2.0, %v1060
  %v1093 = vsub.f32 2.0, %v1061
  %v1094 = vsub.f32 2.0, %v1062
  %v1095 = vsub.f32 2.0, %v1063
  %v1096 = vsub.f32 2.0, %v1064
  %v1097 = vsub.f32 2.0, %v1065
  %v1098 = vsub.f32 2.0, %v1066
  %v1099 = vsub.f32 2.0, %v1067
  %v1100 = vsub.f32 2.0, %v1068
  %v1101 = vsub.f32 2.0, %v1069
  %v1102 = vsub.f32 2.0, %v1070
  %v1103 = vsub.f32 2.0, %v1071
  %v1104 = vsub.f32 2.0, %v1072
  %v1105 = vsub.f32 2.0, %v1073
  %v1106 = vsub.f32 2.0, %v1074
  %v1107 = vsub.f32 2.0, %v1075
  %v1108 = vsub.f32 2.0, %v1076
  %v1109 = vsub.f32 2.0, %v1077
  %v1110 = vsub.f32 2.0, %v1078
  %v1111 = vsub.f32 2.0, %v1079
  %v1112 = vsub.f32 2.0, %v1080
  %v1113 = vsub.f32 2.0, %v1081
  %v1114 = vsub.f32 2.0, %v1082
  %v1115 = vsub.f32 2.0, %v1083
  %v1116 = vsub.f32 2.0, %v1084
  %v1117 = vsub.f32 2.0, %v1085
  %v1118 = vmul.f32 %v1022, %v1086
  %v1119 = vmul.f32 %v1023, %v1087
  %v1120 = vmul.f32 %v1024, %v1088
  %v1121 = vmul.f32 %v1025, %v1089
  %v1122 = vmul.f32 %v1026, %v1090
  %v1123 = vmul.f32 %v1027, %v1091
  %v1124 = vmul.f32 %v1028, %v1092
  %v1125 = vmul.f32 %v1029, %v1093
  %v1126 = vmul.f32 %v1030, %v1094
  %v1127 = vmul.f32 %v1031, %v1095
  %v1128 = vmul.f32 %v1032, %v1096
  %v1129 = vmul.f32 %v1033, %v1097
  %v1130 = vmul.f32 %v1034, %v1098
  %v1131 = vmul.f32 %v1035, %v1099
  %v1132 = vmul.f32 %v1036, %v1100
  %v1133 = vmul.f32 %v1037, %v1101
  %v1134 = vmul.f32 %v1038, %v1102
  %v1135 = vmul.f32 %v1039, %v1103
  %v1136 = vmul.f32 %v1040, %v1104
  %v1137 = vmul.f32 %v1041, %v1105
  %v1138 = vmul.f32 %v1042, %v1106
  %v1139 = vmul.f32 %v1043, %v1107
  %v1140 = vmul.f32 %v1044, %v1108
  %v1141 = vmul.f32 %v1045, %v1109
  %v1142 = vmul.f32 %v1046, %v1110
  %v1143 = vmul.f32 %v1047, %v1111
  %v1144 = vmul.f32 %v1048, %v1112
  %v1145 = vmul.f32 %v1049, %v1113
  %v1146 = vmul.f32 %v1050, %v1114
  %v1147 = vmul.f32 %v1051, %v1115
  %v1148 = vmul.f32 %v1052, %v1116
  %v1149 = vmul.f32 %v1053, %v1117
  %v1150 = vmul.f32 %v799, %v1118
  %v1151 = vmul.f32 %v801, %v1118
  %v1152 = vmul.f32 %v803, %v1119
  %v1153 = vmul.f32 %v805, %v1119
  %v1154 = vmul.f32 %v807, %v1120
  %v1155 = vmul.f32 %v809, %v1120
  %v1156 = vmul.f32 %v811, %v1121
  %v1157 = vmul.f32 %v813, %v1121
  %v1158 = vmul.f32 %v815, %v1122
  %v1159 = vmul.f32 %v817, %v1122
  %v1160 = vmul.f32 %v819, %v1123
  %v1161 = vmul.f32 %v821, %v1123
  %v1162 = vmul.f32 %v823, %v1124
  %v1163 = vmul.f32 %v825, %v1124
  %v1164 = vmul.f32 %v827, %v1125
  %v1165 = vmul.f32 %v829, %v1125
  %v1166 = vmul.f32 %v831, %v1126
  %v1167 = vmul.f32 %v833, %v1126
  %v1168 = vmul.f32 %v835, %v1127
  %v1169 = vmul.f32 %v837, %v1127
  %v1170 = vmul.f32 %v839, %v1128
  %v1171 = vmul.f32 %v841, %v1128
  %v1172 = vmul.f32 %v843, %v1129
  %v1173 = vmul.f32 %v845, %v1129
  %v1174 = vmul.f32 %v847, %v1130
  %v1175 = vmul.f32 %v849, %v1130
  %v1176 = vmul.f32 %v851, %v1131
  %v1177 = vmul.f32 %v853, %v1131
  %v1178 = vmul.f32 %v855, %v1132
  %v1179 = vmul.f32 %v857, %v1132
  %v1180 = vmul.f32 %v859, %v1133
  %v1181 = vmul.f32 %v861, %v1133
  %v1182 = vmul.f32 %v863, %v1134
  %v1183 = vmul.f32 %v865, %v1134
  %v1184 = vmul.f32 %v867, %v1135
  %v1185 = vmul.f32 %v869, %v1135
  %v1186 = vmul.f32 %v871, %v1136
  %v1187 = vmul.f32 %v873, %v1136
  %v1188 = vmul.f32 %v875, %v1137
  %v1189 = vmul.f32 %v877, %v1137
  %v1190 = vmul.f32 %v879, %v1138
  %v1191 = vmul.f32 %v881, %v1138
  %v1192 = vmul.f32 %v883, %v1139
  %v1193 = vmul.f32 %v885, %v1139
  %v1194 = vmul.f32 %v887, %v1140
  %v1195 = vmul.f32 %v889, %v1140
  %v1196 = vmul.f32 %v891, %v1141
  %v1197 = vmul.f32 %v893, %v1141
  %v1198 = vmul.f32 %v895, %v1142
  %v1199 = vmul.f32 %v897, %v1142
  %v1200 = vmul.f32 %v899, %v1143
  %v1201 = vmul.f32 %v901, %v1143
  %v1202 = vmul.f32 %v903, %v1144
  %v1203 = vmul.f32 %v905, %v1144
  %v1204 = vmul.f32 %v907, %v1145
  %v1205 = vmul.f32 %v909, %v1145
  %v1206 = vmul.f32 %v911, %v1146
  %v1207 = vmul.f32 %v913, %v1146
  %v1208 = vmul.f32 %v915, %v1147
  %v1209 = vmul.f32 %v917, %v1147
  %v1210 = vmul.f32 %v919, %v1148
  %v1211 = vmul.f32 %v921, %v1148
  %v1212 = vmul.f32 %v923, %v1149
  %v1213 = vmul.f32 %v925, %v1149
  %1214 = vmatprep.subr.mxu0 %v1151
  %1215 = vmatpush1.xpose.msra.mxu0 %v1150
  %1216 = vmatprep.subr.mxu0 %v1153
  %1217 = vmatpush1.xpose.msra.mxu0 %v1152
  %1218 = vmatprep.subr.mxu0 %v1155
  %1219 = vmatpush1.xpose.msra.mxu0 %v1154
  %1220 = vmatprep.subr.mxu0 %v1157
  %1221 = vmatpush1.xpose.msra.mxu0 %v1156
  %1222 = vmatprep.subr.mxu0 %v1159
  %1223 = vmatpush1.xpose.msra.mxu0 %v1158
  %1224 = vmatprep.subr.mxu0 %v1161
  %1225 = vmatpush1.xpose.msra.mxu0 %v1160
  %1226 = vmatprep.subr.mxu0 %v1163
  %1227 = vmatpush1.xpose.msra.mxu0 %v1162
  %1228 = vmatprep.subr.mxu0 %v1165
  %1229 = vmatpush1.xpose.msra.mxu0 %v1164
  %1230 = vmatprep.subr.mxu0 %v1167
  %1231 = vmatpush1.xpose.msra.mxu0 %v1166
  %1232 = vmatprep.subr.mxu0 %v1169
  %1233 = vmatpush1.xpose.msra.mxu0 %v1168
  %1234 = vmatprep.subr.mxu0 %v1171
  %1235 = vmatpush1.xpose.msra.mxu0 %v1170
  %1236 = vmatprep.subr.mxu0 %v1173
  %1237 = vmatpush1.xpose.msra.mxu0 %v1172
  %1238 = vmatprep.subr.mxu0 %v1175
  %1239 = vmatpush1.xpose.msra.mxu0 %v1174
  %1240 = vmatprep.subr.mxu0 %v1177
  %1241 = vmatpush1.xpose.msra.mxu0 %v1176
  %1242 = vmatprep.subr.mxu0 %v1179
  %1243 = vmatpush1.xpose.msra.mxu0 %v1178
  %1244 = vmatprep.subr.mxu0 %v1181
  %1245 = vmatpush1.xpose.msra.mxu0 %v1180
  %1246 = vmatprep.subr.mxu0 %v1183
  %1247 = vmatpush1.xpose.msra.mxu0 %v1182
  %1248 = vmatprep.subr.mxu0 %v1185
  %1249 = vmatpush1.xpose.msra.mxu0 %v1184
  %1250 = vmatprep.subr.mxu0 %v1187
  %1251 = vmatpush1.xpose.msra.mxu0 %v1186
  %1252 = vmatprep.subr.mxu0 %v1189
  %1253 = vmatpush1.xpose.msra.mxu0 %v1188
  %1254 = vmatprep.subr.mxu0 %v1191
  %1255 = vmatpush1.xpose.msra.mxu0 %v1190
  %1256 = vmatprep.subr.mxu0 %v1193
  %1257 = vmatpush1.xpose.msra.mxu0 %v1192
  %1258 = vmatprep.subr.mxu0 %v1195
  %1259 = vmatpush1.xpose.msra.mxu0 %v1194
  %1260 = vmatprep.subr.mxu0 %v1197
  %1261 = vmatpush1.xpose.msra.mxu0 %v1196
  %1262 = vmatprep.subr.mxu0 %v1199
  %1263 = vmatpush1.xpose.msra.mxu0 %v1198
  %1264 = vmatprep.subr.mxu0 %v1201
  %1265 = vmatpush1.xpose.msra.mxu0 %v1200
  %1266 = vmatprep.subr.mxu0 %v1203
  %1267 = vmatpush1.xpose.msra.mxu0 %v1202
  %1268 = vmatprep.subr.mxu0 %v1205
  %1269 = vmatpush1.xpose.msra.mxu0 %v1204
  %1270 = vmatprep.subr.mxu0 %v1207
  %1271 = vmatpush1.xpose.msra.mxu0 %v1206
  %1272 = vmatprep.subr.mxu0 %v1209
  %1273 = vmatpush1.xpose.msra.mxu0 %v1208
  %1274 = vmatprep.subr.mxu0 %v1211
  %1275 = vmatpush1.xpose.msra.mxu0 %v1210
  %1276 = vmatprep.subr.mxu0 %v1213
  %1277 = vmatpush1.xpose.msra.mxu0 %v1212
  %1278 = vmatprep.mubr.f32.mxu0 %v218
  %1279 = vmatmul.mubr.f32.gmra.mrb[0].mxu0 %v216
  %v1280 = vpop.f32.mrb[0].mxu0
  %v1281 = vadd.f32 0.0, %v1280
  %v1282 = vpop.f32.mrb[0].mxu0
  %v1283 = vadd.f32 0.0, %v1282
  %1284 = vdwg.mxu0
  %1286 = vset.pattern.permute.xlu0 0
  %1287 = vperm.xlu0 %1286, %v35
  %v1288 = vpop.permute.xlu0 %1287
  %v1291 = vsel %vm284, %v34, 0
  %1293 = vmatprep.subr.mxu0 %v1283
  %1294 = vmatpush1.msra.mxu0 %v1281
  %1295 = vmatprep.subr.mxu0 0.0
  %1296 = vmatpush1.msra.mxu0 0.0
  %1297 = vmatprep.subr.mxu0 0.0
  %1298 = vmatpush1.msra.mxu0 0.0
  %1299 = vmatprep.subr.mxu0 0.0
  %1300 = vmatpush1.msra.mxu0 0.0
  %1301 = vmatprep.subr.mxu0 0.0
  %1302 = vmatpush1.msra.mxu0 0.0
  %1303 = vmatprep.subr.mxu0 0.0
  %1304 = vmatpush1.msra.mxu0 0.0
  %1305 = vmatprep.subr.mxu0 0.0
  %1306 = vmatpush1.msra.mxu0 0.0
  %1307 = vmatprep.subr.mxu0 0.0
  %1308 = vmatpush1.msra.mxu0 0.0
  %1309 = vmatprep.subr.mxu0 0.0
  %1310 = vmatpush1.msra.mxu0 0.0
  %1311 = vmatprep.subr.mxu0 0.0
  %1312 = vmatpush1.msra.mxu0 0.0
  %1313 = vmatprep.subr.mxu0 0.0
  %1314 = vmatpush1.msra.mxu0 0.0
  %1315 = vmatprep.subr.mxu0 0.0
  %1316 = vmatpush1.msra.mxu0 0.0
  %1317 = vmatprep.subr.mxu0 0.0
  %1318 = vmatpush1.msra.mxu0 0.0
  %1319 = vmatprep.subr.mxu0 0.0
  %1320 = vmatpush1.msra.mxu0 0.0
  %1321 = vmatprep.subr.mxu0 0.0
  %1322 = vmatpush1.msra.mxu0 0.0
  %1323 = vmatprep.subr.mxu0 0.0
  %1324 = vmatpush1.msra.mxu0 0.0
  %1325 = vmatprep.subr.mxu0 0.0
  %1326 = vmatpush1.msra.mxu0 0.0
  %1327 = vmatprep.subr.mxu0 0.0
  %1328 = vmatpush1.msra.mxu0 0.0
  %1329 = vmatprep.subr.mxu0 0.0
  %1330 = vmatpush1.msra.mxu0 0.0
  %1331 = vmatprep.subr.mxu0 0.0
  %1332 = vmatpush1.msra.mxu0 0.0
  %1333 = vmatprep.subr.mxu0 0.0
  %1334 = vmatpush1.msra.mxu0 0.0
  %1335 = vmatprep.subr.mxu0 0.0
  %1336 = vmatpush1.msra.mxu0 0.0
  %1337 = vmatprep.subr.mxu0 0.0
  %1338 = vmatpush1.msra.mxu0 0.0
  %1339 = vmatprep.subr.mxu0 0.0
  %1340 = vmatpush1.msra.mxu0 0.0
  %1341 = vmatprep.subr.mxu0 0.0
  %1342 = vmatpush1.msra.mxu0 0.0
  %1343 = vmatprep.subr.mxu0 0.0
  %1344 = vmatpush1.msra.mxu0 0.0
  %1345 = vmatprep.subr.mxu0 0.0
  %1346 = vmatpush1.msra.mxu0 0.0
  %1347 = vmatprep.subr.mxu0 0.0
  %1348 = vmatpush1.msra.mxu0 0.0
  %1349 = vmatprep.subr.mxu0 0.0
  %1350 = vmatpush1.msra.mxu0 0.0
  %1351 = vmatprep.subr.mxu0 0.0
  %1352 = vmatpush1.msra.mxu0 0.0
  %1353 = vmatprep.subr.mxu0 0.0
  %1354 = vmatpush1.msra.mxu0 0.0
  %1355 = vmatprep.subr.mxu0 0.0
  %1356 = vmatpush1.msra.mxu0 0.0
  %1357 = vmatprep.mubr.f32.mxu0 0.0
  %1358 = vmatmul.mubr.f32.gmra.mrb[0].mxu0 %v1291
  %v1359 = vpop.f32.mrb[0].mxu0
  %v1360 = vadd.f32 %v1288, %v1359
  %v1361 = vpop.f32.mrb[0].mxu0
  %v1362 = vadd.f32 %v1288, %v1361
  %1363 = vdwg.mxu0
  %1364 = vst [vmem:[%s7] sm:$0xff] %v1360
  %1365 = vst [vmem:[%s7 + $0x8] sm:$0xff] %v1362
  %s1366 = scalar_lea.vmem %s0, 8
  %v1367 = vld [vmem:[%s1366] sm:$0xff]
  %v1369 = vcombine.high %v1367, %v1367
  %v1371 = vsel %vm40, %v1367, 0.0
  %v1372 = vsel %vm40, %v1369, 0.0
  %v1373 = vadd.f32 %v1371, %v1372
  %1374 = vadd.xlane.f32.xlu0 %v1373
  %v1375 = vpop.xlane.xlu0 %1374
  %v1376 = vmul.f32 %v1375, %v46
  %v1379 = vunpack.c.l.s4 839922192
  %v1380 = vunpack.c.0.s8 %v1379
  %v1381 = vlaneseq
  %v1382 = vshrl.u32 %v1381, 7
  %v1383 = vsub.s32 %v1380, %v1382
  %v1384 = vrot.slane %v1376, %v1383
  %v1386 = vsub.f32 %v1367, %v1384
  %v1387 = vmul.f32 %v1386, %v1386
  %v1389 = vcombine.high %v1387, %v1387
  %v1391 = vsel %vm40, %v1387, 0.0
  %v1392 = vsel %vm40, %v1389, 0.0
  %v1393 = vadd.f32 %v1391, %v1392
  %1394 = vadd.xlane.f32.xlu0 %v1393
  %v1395 = vpop.xlane.xlu0 %1394
  %v1396 = vmul.f32 %v1395, %v46
  %v1397 = vadd.f32 %v1396, 1e-05
  %v1398 = vrsqrt.pop %v1397
  %v1401 = vunpack.c.l.s4 839922192
  %v1402 = vunpack.c.0.s8 %v1401
  %v1403 = vlaneseq
  %v1404 = vshrl.u32 %v1403, 7
  %v1405 = vsub.s32 %v1402, %v1404
  %v1406 = vrot.slane %v1398, %v1405
  %v1408 = vmul.f32 %v1386, %v1406
  %v1409 = vmul.f32 %v1408, %v90
  %v1410 = vadd.f32 %v1409, %v103
  %v1412 = vcombine.high %v1410, %v1410
  %v1413 = vsel %vm40, %v1410, 0
  %v1415 = vsel %vm40, %v1412, 0
  %1417 = vmatprep.subr.mxu0 %v1415
  %1418 = vmatpush1.msra.mxu0 %v1413
  %1419 = vmatprep.subr.mxu0 0.0
  %1420 = vmatpush1.msra.mxu0 0.0
  %1421 = vmatprep.subr.mxu0 0.0
  %1422 = vmatpush1.msra.mxu0 0.0
  %1423 = vmatprep.subr.mxu0 0.0
  %1424 = vmatpush1.msra.mxu0 0.0
  %1425 = vmatprep.subr.mxu0 0.0
  %1426 = vmatpush1.msra.mxu0 0.0
  %1427 = vmatprep.subr.mxu0 0.0
  %1428 = vmatpush1.msra.mxu0 0.0
  %1429 = vmatprep.subr.mxu0 0.0
  %1430 = vmatpush1.msra.mxu0 0.0
  %1431 = vmatprep.subr.mxu0 0.0
  %1432 = vmatpush1.msra.mxu0 0.0
  %1433 = vmatprep.subr.mxu0 0.0
  %1434 = vmatpush1.msra.mxu0 0.0
  %1435 = vmatprep.subr.mxu0 0.0
  %1436 = vmatpush1.msra.mxu0 0.0
  %1437 = vmatprep.subr.mxu0 0.0
  %1438 = vmatpush1.msra.mxu0 0.0
  %1439 = vmatprep.subr.mxu0 0.0
  %1440 = vmatpush1.msra.mxu0 0.0
  %1441 = vmatprep.subr.mxu0 0.0
  %1442 = vmatpush1.msra.mxu0 0.0
  %1443 = vmatprep.subr.mxu0 0.0
  %1444 = vmatpush1.msra.mxu0 0.0
  %1445 = vmatprep.subr.mxu0 0.0
  %1446 = vmatpush1.msra.mxu0 0.0
  %1447 = vmatprep.subr.mxu0 0.0
  %1448 = vmatpush1.msra.mxu0 0.0
  %1449 = vmatprep.subr.mxu0 0.0
  %1450 = vmatpush1.msra.mxu0 0.0
  %1451 = vmatprep.subr.mxu0 0.0
  %1452 = vmatpush1.msra.mxu0 0.0
  %1453 = vmatprep.subr.mxu0 0.0
  %1454 = vmatpush1.msra.mxu0 0.0
  %1455 = vmatprep.subr.mxu0 0.0
  %1456 = vmatpush1.msra.mxu0 0.0
  %1457 = vmatprep.subr.mxu0 0.0
  %1458 = vmatpush1.msra.mxu0 0.0
  %1459 = vmatprep.subr.mxu0 0.0
  %1460 = vmatpush1.msra.mxu0 0.0
  %1461 = vmatprep.subr.mxu0 0.0
  %1462 = vmatpush1.msra.mxu0 0.0
  %1463 = vmatprep.subr.mxu0 0.0
  %1464 = vmatpush1.msra.mxu0 0.0
  %1465 = vmatprep.subr.mxu0 0.0
  %1466 = vmatpush1.msra.mxu0 0.0
  %1467 = vmatprep.subr.mxu0 0.0
  %1468 = vmatpush1.msra.mxu0 0.0
  %1469 = vmatprep.subr.mxu0 0.0
  %1470 = vmatpush1.msra.mxu0 0.0
  %1471 = vmatprep.subr.mxu0 0.0
  %1472 = vmatpush1.msra.mxu0 0.0
  %1473 = vmatprep.subr.mxu0 0.0
  %1474 = vmatpush1.msra.mxu0 0.0
  %1475 = vmatprep.subr.mxu0 0.0
  %1476 = vmatpush1.msra.mxu0 0.0
  %1477 = vmatprep.subr.mxu0 0.0
  %1478 = vmatpush1.msra.mxu0 0.0
  %1479 = vmatprep.subr.mxu0 0.0
  %1480 = vmatpush1.msra.mxu0 0.0
  %1481 = vmatprep.mubr.f32.mxu0 0.0
  %1482 = vmatmul.mubr.f32.gmra.mrb[0].mxu0 %v125
  %v1483 = vpop.f32.mrb[0].mxu0
  %v1484 = vadd.f32 %v109, %v1483
  %v1485 = vpop.f32.mrb[0].mxu0
  %v1486 = vadd.f32 %v109, %v1485
  %1487 = vmatprep.mubr.f32.mxu0 0.0
  %1488 = vmatmul.mubr.f32.gmra.mrb[0].mxu0 %v128
  %v1489 = vpop.f32.mrb[0].mxu0
  %v1490 = vadd.f32 %v114, %v1489
  %v1491 = vpop.f32.mrb[0].mxu0
  %v1492 = vadd.f32 %v114, %v1491
  %1493 = vmatprep.mubr.f32.mxu0 0.0
  %1494 = vmatmul.mubr.f32.gmra.mrb[0].mxu0 %v131
  %v1495 = vpop.f32.mrb[0].mxu0
  %v1496 = vadd.f32 %v119, %v1495
  %v1497 = vpop.f32.mrb[0].mxu0
  %v1498 = vadd.f32 %v119, %v1497
  %1499 = vdwg.mxu0
  %1500 = vxpose.xlu0.b32.start [1/16] %v1484, 128
  %1501 = vxpose.xlu0.b32.cont [2/16] 0.0, 128
  %1502 = vxpose.xlu0.b32.cont [3/16] 0.0, 128
  %1503 = vxpose.xlu0.b32.cont [4/16] 0.0, 128
  %1504 = vxpose.xlu0.b32.cont [5/16] 0.0, 128
  %1505 = vxpose.xlu0.b32.cont [6/16] 0.0, 128
  %1506 = vxpose.xlu0.b32.cont [7/16] 0.0, 128
  %1507 = vxpose.xlu0.b32.cont [8/16] 0.0, 128
  %1508 = vxpose.xlu0.b32.cont [9/16] 0.0, 128
  %1509 = vxpose.xlu0.b32.cont [10/16] 0.0, 128
  %1510 = vxpose.xlu0.b32.cont [11/16] 0.0, 128
  %1511 = vxpose.xlu0.b32.cont [12/16] 0.0, 128
  %1512 = vxpose.xlu0.b32.cont [13/16] 0.0, 128
  %1513 = vxpose.xlu0.b32.cont [14/16] 0.0, 128
  %1514 = vxpose.xlu0.b32.cont [15/16] 0.0, 128
  %1515 = vxpose.xlu0.b32.end [16/16] 0.0, 128
  %v1516 = vpop.trf.xlu0
  %v1517 = vpop.trf.xlu0
  %v1518 = vpop.trf.xlu0
  %v1519 = vpop.trf.xlu0
  %v1520 = vpop.trf.xlu0
  %v1521 = vpop.trf.xlu0
  %v1522 = vpop.trf.xlu0
  %v1523 = vpop.trf.xlu0
  %v1524 = vpop.trf.xlu0
  %v1525 = vpop.trf.xlu0
  %v1526 = vpop.trf.xlu0
  %v1527 = vpop.trf.xlu0
  %v1528 = vpop.trf.xlu0
  %v1529 = vpop.trf.xlu0
  %v1530 = vpop.trf.xlu0
  %v1531 = vpop.trf.xlu0
  %1532 = vxpose.xlu0.b32.start [1/16] %v1486, 128
  %1533 = vxpose.xlu0.b32.cont [2/16] 0.0, 128
  %1534 = vxpose.xlu0.b32.cont [3/16] 0.0, 128
  %1535 = vxpose.xlu0.b32.cont [4/16] 0.0, 128
  %1536 = vxpose.xlu0.b32.cont [5/16] 0.0, 128
  %1537 = vxpose.xlu0.b32.cont [6/16] 0.0, 128
  %1538 = vxpose.xlu0.b32.cont [7/16] 0.0, 128
  %1539 = vxpose.xlu0.b32.cont [8/16] 0.0, 128
  %1540 = vxpose.xlu0.b32.cont [9/16] 0.0, 128
  %1541 = vxpose.xlu0.b32.cont [10/16] 0.0, 128
  %1542 = vxpose.xlu0.b32.cont [11/16] 0.0, 128
  %1543 = vxpose.xlu0.b32.cont [12/16] 0.0, 128
  %1544 = vxpose.xlu0.b32.cont [13/16] 0.0, 128
  %1545 = vxpose.xlu0.b32.cont [14/16] 0.0, 128
  %1546 = vxpose.xlu0.b32.cont [15/16] 0.0, 128
  %1547 = vxpose.xlu0.b32.end [16/16] 0.0, 128
  %v1548 = vpop.trf.xlu0
  %v1549 = vpop.trf.xlu0
  %v1550 = vpop.trf.xlu0
  %v1551 = vpop.trf.xlu0
  %v1552 = vpop.trf.xlu0
  %v1553 = vpop.trf.xlu0
  %v1554 = vpop.trf.xlu0
  %v1555 = vpop.trf.xlu0
  %v1556 = vpop.trf.xlu0
  %v1557 = vpop.trf.xlu0
  %v1558 = vpop.trf.xlu0
  %v1559 = vpop.trf.xlu0
  %v1560 = vpop.trf.xlu0
  %v1561 = vpop.trf.xlu0
  %v1562 = vpop.trf.xlu0
  %v1563 = vpop.trf.xlu0
  %v1565 = vsel %vm284, %v1516, 0
  %v1568 = vsel %vm284, %v1517, 0
  %v1571 = vsel %vm284, %v1518, 0
  %v1574 = vsel %vm284, %v1519, 0
  %v1577 = vsel %vm284, %v1520, 0
  %v1580 = vsel %vm284, %v1521, 0
  %v1583 = vsel %vm284, %v1522, 0
  %v1586 = vsel %vm284, %v1523, 0
  %v1589 = vsel %vm284, %v1524, 0
  %v1592 = vsel %vm284, %v1525, 0
  %v1595 = vsel %vm284, %v1526, 0
  %v1598 = vsel %vm284, %v1527, 0
  %v1601 = vsel %vm284, %v1528, 0
  %v1604 = vsel %vm284, %v1529, 0
  %v1607 = vsel %vm284, %v1530, 0
  %v1610 = vsel %vm284, %v1531, 0
  %v1613 = vsel %vm284, %v1548, 0
  %v1616 = vsel %vm284, %v1549, 0
  %v1619 = vsel %vm284, %v1550, 0
  %v1622 = vsel %vm284, %v1551, 0
  %v1625 = vsel %vm284, %v1552, 0
  %v1628 = vsel %vm284, %v1553, 0
  %v1631 = vsel %vm284, %v1554, 0
  %v1634 = vsel %vm284, %v1555, 0
  %v1637 = vsel %vm284, %v1556, 0
  %v1640 = vsel %vm284, %v1557, 0
  %v1643 = vsel %vm284, %v1558, 0
  %v1646 = vsel %vm284, %v1559, 0
  %v1649 = vsel %vm284, %v1560, 0
  %v1652 = vsel %vm284, %v1561, 0
  %v1655 = vsel %vm284, %v1562, 0
  %v1658 = vsel %vm284, %v1563, 0
  %1660 = vmatprep.subr.mxu0 %v1492
  %1661 = vmatpush1.msra.mxu0 %v1490
  %1662 = vmatprep.subr.mxu0 0.0
  %1663 = vmatpush1.msra.mxu0 0.0
  %1664 = vmatprep.subr.mxu0 0.0
  %1665 = vmatpush1.msra.mxu0 0.0
  %1666 = vmatprep.subr.mxu0 0.0
  %1667 = vmatpush1.msra.mxu0 0.0
  %1668 = vmatprep.subr.mxu0 0.0
  %1669 = vmatpush1.msra.mxu0 0.0
  %1670 = vmatprep.subr.mxu0 0.0
  %1671 = vmatpush1.msra.mxu0 0.0
  %1672 = vmatprep.subr.mxu0 0.0
  %1673 = vmatpush1.msra.mxu0 0.0
  %1674 = vmatprep.subr.mxu0 0.0
  %1675 = vmatpush1.msra.mxu0 0.0
  %1676 = vmatprep.subr.mxu0 0.0
  %1677 = vmatpush1.msra.mxu0 0.0
  %1678 = vmatprep.subr.mxu0 0.0
  %1679 = vmatpush1.msra.mxu0 0.0
  %1680 = vmatprep.subr.mxu0 0.0
  %1681 = vmatpush1.msra.mxu0 0.0
  %1682 = vmatprep.subr.mxu0 0.0
  %1683 = vmatpush1.msra.mxu0 0.0
  %1684 = vmatprep.subr.mxu0 0.0
  %1685 = vmatpush1.msra.mxu0 0.0
  %1686 = vmatprep.subr.mxu0 0.0
  %1687 = vmatpush1.msra.mxu0 0.0
  %1688 = vmatprep.subr.mxu0 0.0
  %1689 = vmatpush1.msra.mxu0 0.0
  %1690 = vmatprep.subr.mxu0 0.0
  %1691 = vmatpush1.msra.mxu0 0.0
  %1692 = vmatprep.subr.mxu0 0.0
  %1693 = vmatpush1.msra.mxu0 0.0
  %1694 = vmatprep.subr.mxu0 0.0
  %1695 = vmatpush1.msra.mxu0 0.0
  %1696 = vmatprep.subr.mxu0 0.0
  %1697 = vmatpush1.msra.mxu0 0.0
  %1698 = vmatprep.subr.mxu0 0.0
  %1699 = vmatpush1.msra.mxu0 0.0
  %1700 = vmatprep.subr.mxu0 0.0
  %1701 = vmatpush1.msra.mxu0 0.0
  %1702 = vmatprep.subr.mxu0 0.0
  %1703 = vmatpush1.msra.mxu0 0.0
  %1704 = vmatprep.subr.mxu0 0.0
  %1705 = vmatpush1.msra.mxu0 0.0
  %1706 = vmatprep.subr.mxu0 0.0
  %1707 = vmatpush1.msra.mxu0 0.0
  %1708 = vmatprep.subr.mxu0 0.0
  %1709 = vmatpush1.msra.mxu0 0.0
  %1710 = vmatprep.subr.mxu0 0.0
  %1711 = vmatpush1.msra.mxu0 0.0
  %1712 = vmatprep.subr.mxu0 0.0
  %1713 = vmatpush1.msra.mxu0 0.0
  %1714 = vmatprep.subr.mxu0 0.0
  %1715 = vmatpush1.msra.mxu0 0.0
  %1716 = vmatprep.subr.mxu0 0.0
  %1717 = vmatpush1.msra.mxu0 0.0
  %1718 = vmatprep.subr.mxu0 0.0
  %1719 = vmatpush1.msra.mxu0 0.0
  %1720 = vmatprep.subr.mxu0 0.0
  %1721 = vmatpush1.msra.mxu0 0.0
  %1722 = vmatprep.subr.mxu0 0.0
  %1723 = vmatpush1.msra.mxu0 0.0
  %1724 = vmatprep.mubr.f32.mxu0 0.0
  %1725 = vmatmul.mubr.f32.gmra.mrb[0].mxu0 %v1565
  %v1726 = vpop.f32.mrb[0].mxu0
  %v1727 = vadd.f32 0.0, %v1726
  %v1728 = vpop.f32.mrb[0].mxu0
  %v1729 = vadd.f32 0.0, %v1728
  %1730 = vmatprep.mubr.f32.mxu0 0.0
  %1731 = vmatmul.mubr.f32.gmra.mrb[0].mxu0 %v1568
  %v1732 = vpop.f32.mrb[0].mxu0
  %v1733 = vadd.f32 0.0, %v1732
  %v1734 = vpop.f32.mrb[0].mxu0
  %v1735 = vadd.f32 0.0, %v1734
  %1736 = vmatprep.mubr.f32.mxu0 0.0
  %1737 = vmatmul.mubr.f32.gmra.mrb[0].mxu0 %v1571
  %v1738 = vpop.f32.mrb[0].mxu0
  %v1739 = vadd.f32 0.0, %v1738
  %v1740 = vpop.f32.mrb[0].mxu0
  %v1741 = vadd.f32 0.0, %v1740
  %1742 = vmatprep.mubr.f32.mxu0 0.0
  %1743 = vmatmul.mubr.f32.gmra.mrb[0].mxu0 %v1574
  %v1744 = vpop.f32.mrb[0].mxu0
  %v1745 = vadd.f32 0.0, %v1744
  %v1746 = vpop.f32.mrb[0].mxu0
  %v1747 = vadd.f32 0.0, %v1746
  %1748 = vmatprep.mubr.f32.mxu0 0.0
  %1749 = vmatmul.mubr.f32.gmra.mrb[0].mxu0 %v1577
  %v1750 = vpop.f32.mrb[0].mxu0
  %v1751 = vadd.f32 0.0, %v1750
  %v1752 = vpop.f32.mrb[0].mxu0
  %v1753 = vadd.f32 0.0, %v1752
  %1754 = vmatprep.mubr.f32.mxu0 0.0
  %1755 = vmatmul.mubr.f32.gmra.mrb[0].mxu0 %v1580
  %v1756 = vpop.f32.mrb[0].mxu0
  %v1757 = vadd.f32 0.0, %v1756
  %v1758 = vpop.f32.mrb[0].mxu0
  %v1759 = vadd.f32 0.0, %v1758
  %1760 = vmatprep.mubr.f32.mxu0 0.0
  %1761 = vmatmul.mubr.f32.gmra.mrb[0].mxu0 %v1583
  %v1762 = vpop.f32.mrb[0].mxu0
  %v1763 = vadd.f32 0.0, %v1762
  %v1764 = vpop.f32.mrb[0].mxu0
  %v1765 = vadd.f32 0.0, %v1764
  %1766 = vmatprep.mubr.f32.mxu0 0.0
  %1767 = vmatmul.mubr.f32.gmra.mrb[0].mxu0 %v1586
  %v1768 = vpop.f32.mrb[0].mxu0
  %v1769 = vadd.f32 0.0, %v1768
  %v1770 = vpop.f32.mrb[0].mxu0
  %v1771 = vadd.f32 0.0, %v1770
  %1772 = vmatprep.mubr.f32.mxu0 0.0
  %1773 = vmatmul.mubr.f32.gmra.mrb[0].mxu0 %v1589
  %v1774 = vpop.f32.mrb[0].mxu0
  %v1775 = vadd.f32 0.0, %v1774
  %v1776 = vpop.f32.mrb[0].mxu0
  %v1777 = vadd.f32 0.0, %v1776
  %1778 = vmatprep.mubr.f32.mxu0 0.0
  %1779 = vmatmul.mubr.f32.gmra.mrb[0].mxu0 %v1592
  %v1780 = vpop.f32.mrb[0].mxu0
  %v1781 = vadd.f32 0.0, %v1780
  %v1782 = vpop.f32.mrb[0].mxu0
  %v1783 = vadd.f32 0.0, %v1782
  %1784 = vmatprep.mubr.f32.mxu0 0.0
  %1785 = vmatmul.mubr.f32.gmra.mrb[0].mxu0 %v1595
  %v1786 = vpop.f32.mrb[0].mxu0
  %v1787 = vadd.f32 0.0, %v1786
  %v1788 = vpop.f32.mrb[0].mxu0
  %v1789 = vadd.f32 0.0, %v1788
  %1790 = vmatprep.mubr.f32.mxu0 0.0
  %1791 = vmatmul.mubr.f32.gmra.mrb[0].mxu0 %v1598
  %v1792 = vpop.f32.mrb[0].mxu0
  %v1793 = vadd.f32 0.0, %v1792
  %v1794 = vpop.f32.mrb[0].mxu0
  %v1795 = vadd.f32 0.0, %v1794
  %1796 = vmatprep.mubr.f32.mxu0 0.0
  %1797 = vmatmul.mubr.f32.gmra.mrb[0].mxu0 %v1601
  %v1798 = vpop.f32.mrb[0].mxu0
  %v1799 = vadd.f32 0.0, %v1798
  %v1800 = vpop.f32.mrb[0].mxu0
  %v1801 = vadd.f32 0.0, %v1800
  %1802 = vmatprep.mubr.f32.mxu0 0.0
  %1803 = vmatmul.mubr.f32.gmra.mrb[0].mxu0 %v1604
  %v1804 = vpop.f32.mrb[0].mxu0
  %v1805 = vadd.f32 0.0, %v1804
  %v1806 = vpop.f32.mrb[0].mxu0
  %v1807 = vadd.f32 0.0, %v1806
  %1808 = vmatprep.mubr.f32.mxu0 0.0
  %1809 = vmatmul.mubr.f32.gmra.mrb[0].mxu0 %v1607
  %v1810 = vpop.f32.mrb[0].mxu0
  %v1811 = vadd.f32 0.0, %v1810
  %v1812 = vpop.f32.mrb[0].mxu0
  %v1813 = vadd.f32 0.0, %v1812
  %1814 = vmatprep.mubr.f32.mxu0 0.0
  %1815 = vmatmul.mubr.f32.gmra.mrb[0].mxu0 %v1610
  %v1816 = vpop.f32.mrb[0].mxu0
  %v1817 = vadd.f32 0.0, %v1816
  %v1818 = vpop.f32.mrb[0].mxu0
  %v1819 = vadd.f32 0.0, %v1818
  %1820 = vmatprep.mubr.f32.mxu0 0.0
  %1821 = vmatmul.mubr.f32.gmra.mrb[0].mxu0 %v1613
  %v1822 = vpop.f32.mrb[0].mxu0
  %v1823 = vadd.f32 0.0, %v1822
  %v1824 = vpop.f32.mrb[0].mxu0
  %v1825 = vadd.f32 0.0, %v1824
  %1826 = vmatprep.mubr.f32.mxu0 0.0
  %1827 = vmatmul.mubr.f32.gmra.mrb[0].mxu0 %v1616
  %v1828 = vpop.f32.mrb[0].mxu0
  %v1829 = vadd.f32 0.0, %v1828
  %v1830 = vpop.f32.mrb[0].mxu0
  %v1831 = vadd.f32 0.0, %v1830
  %1832 = vmatprep.mubr.f32.mxu0 0.0
  %1833 = vmatmul.mubr.f32.gmra.mrb[0].mxu0 %v1619
  %v1834 = vpop.f32.mrb[0].mxu0
  %v1835 = vadd.f32 0.0, %v1834
  %v1836 = vpop.f32.mrb[0].mxu0
  %v1837 = vadd.f32 0.0, %v1836
  %1838 = vmatprep.mubr.f32.mxu0 0.0
  %1839 = vmatmul.mubr.f32.gmra.mrb[0].mxu0 %v1622
  %v1840 = vpop.f32.mrb[0].mxu0
  %v1841 = vadd.f32 0.0, %v1840
  %v1842 = vpop.f32.mrb[0].mxu0
  %v1843 = vadd.f32 0.0, %v1842
  %1844 = vmatprep.mubr.f32.mxu0 0.0
  %1845 = vmatmul.mubr.f32.gmra.mrb[0].mxu0 %v1625
  %v1846 = vpop.f32.mrb[0].mxu0
  %v1847 = vadd.f32 0.0, %v1846
  %v1848 = vpop.f32.mrb[0].mxu0
  %v1849 = vadd.f32 0.0, %v1848
  %1850 = vmatprep.mubr.f32.mxu0 0.0
  %1851 = vmatmul.mubr.f32.gmra.mrb[0].mxu0 %v1628
  %v1852 = vpop.f32.mrb[0].mxu0
  %v1853 = vadd.f32 0.0, %v1852
  %v1854 = vpop.f32.mrb[0].mxu0
  %v1855 = vadd.f32 0.0, %v1854
  %1856 = vmatprep.mubr.f32.mxu0 0.0
  %1857 = vmatmul.mubr.f32.gmra.mrb[0].mxu0 %v1631
  %v1858 = vpop.f32.mrb[0].mxu0
  %v1859 = vadd.f32 0.0, %v1858
  %v1860 = vpop.f32.mrb[0].mxu0
  %v1861 = vadd.f32 0.0, %v1860
  %1862 = vmatprep.mubr.f32.mxu0 0.0
  %1863 = vmatmul.mubr.f32.gmra.mrb[0].mxu0 %v1634
  %v1864 = vpop.f32.mrb[0].mxu0
  %v1865 = vadd.f32 0.0, %v1864
  %v1866 = vpop.f32.mrb[0].mxu0
  %v1867 = vadd.f32 0.0, %v1866
  %1868 = vmatprep.mubr.f32.mxu0 0.0
  %1869 = vmatmul.mubr.f32.gmra.mrb[0].mxu0 %v1637
  %v1870 = vpop.f32.mrb[0].mxu0
  %v1871 = vadd.f32 0.0, %v1870
  %v1872 = vpop.f32.mrb[0].mxu0
  %v1873 = vadd.f32 0.0, %v1872
  %1874 = vmatprep.mubr.f32.mxu0 0.0
  %1875 = vmatmul.mubr.f32.gmra.mrb[0].mxu0 %v1640
  %v1876 = vpop.f32.mrb[0].mxu0
  %v1877 = vadd.f32 0.0, %v1876
  %v1878 = vpop.f32.mrb[0].mxu0
  %v1879 = vadd.f32 0.0, %v1878
  %1880 = vmatprep.mubr.f32.mxu0 0.0
  %1881 = vmatmul.mubr.f32.gmra.mrb[0].mxu0 %v1643
  %v1882 = vpop.f32.mrb[0].mxu0
  %v1883 = vadd.f32 0.0, %v1882
  %v1884 = vpop.f32.mrb[0].mxu0
  %v1885 = vadd.f32 0.0, %v1884
  %1886 = vmatprep.mubr.f32.mxu0 0.0
  %1887 = vmatmul.mubr.f32.gmra.mrb[0].mxu0 %v1646
  %v1888 = vpop.f32.mrb[0].mxu0
  %v1889 = vadd.f32 0.0, %v1888
  %v1890 = vpop.f32.mrb[0].mxu0
  %v1891 = vadd.f32 0.0, %v1890
  %1892 = vmatprep.mubr.f32.mxu0 0.0
  %1893 = vmatmul.mubr.f32.gmra.mrb[0].mxu0 %v1649
  %v1894 = vpop.f32.mrb[0].mxu0
  %v1895 = vadd.f32 0.0, %v1894
  %v1896 = vpop.f32.mrb[0].mxu0
  %v1897 = vadd.f32 0.0, %v1896
  %1898 = vmatprep.mubr.f32.mxu0 0.0
  %1899 = vmatmul.mubr.f32.gmra.mrb[0].mxu0 %v1652
  %v1900 = vpop.f32.mrb[0].mxu0
  %v1901 = vadd.f32 0.0, %v1900
  %v1902 = vpop.f32.mrb[0].mxu0
  %v1903 = vadd.f32 0.0, %v1902
  %1904 = vmatprep.mubr.f32.mxu0 0.0
  %1905 = vmatmul.mubr.f32.gmra.mrb[0].mxu0 %v1655
  %v1906 = vpop.f32.mrb[0].mxu0
  %v1907 = vadd.f32 0.0, %v1906
  %v1908 = vpop.f32.mrb[0].mxu0
  %v1909 = vadd.f32 0.0, %v1908
  %1910 = vmatprep.mubr.f32.mxu0 0.0
  %1911 = vmatmul.mubr.f32.gmra.mrb[0].mxu0 %v1658
  %v1912 = vpop.f32.mrb[0].mxu0
  %v1913 = vadd.f32 0.0, %v1912
  %v1914 = vpop.f32.mrb[0].mxu0
  %v1915 = vadd.f32 0.0, %v1914
  %1916 = vdwg.mxu0
  %v1917 = vmax.f32 %v1727, %v1729
  %1918 = vmax.xlane.f32.xlu0 %v1917
  %v1919 = vpop.xlane.xlu0 %1918
  %v1920 = vmax.f32 %v1733, %v1735
  %1921 = vmax.xlane.f32.xlu0 %v1920
  %v1922 = vpop.xlane.xlu0 %1921
  %v1923 = vmax.f32 %v1739, %v1741
  %1924 = vmax.xlane.f32.xlu0 %v1923
  %v1925 = vpop.xlane.xlu0 %1924
  %v1926 = vmax.f32 %v1745, %v1747
  %1927 = vmax.xlane.f32.xlu0 %v1926
  %v1928 = vpop.xlane.xlu0 %1927
  %v1929 = vmax.f32 %v1751, %v1753
  %1930 = vmax.xlane.f32.xlu0 %v1929
  %v1931 = vpop.xlane.xlu0 %1930
  %v1932 = vmax.f32 %v1757, %v1759
  %1933 = vmax.xlane.f32.xlu0 %v1932
  %v1934 = vpop.xlane.xlu0 %1933
  %v1935 = vmax.f32 %v1763, %v1765
  %1936 = vmax.xlane.f32.xlu0 %v1935
  %v1937 = vpop.xlane.xlu0 %1936
  %v1938 = vmax.f32 %v1769, %v1771
  %1939 = vmax.xlane.f32.xlu0 %v1938
  %v1940 = vpop.xlane.xlu0 %1939
  %v1941 = vmax.f32 %v1775, %v1777
  %1942 = vmax.xlane.f32.xlu0 %v1941
  %v1943 = vpop.xlane.xlu0 %1942
  %v1944 = vmax.f32 %v1781, %v1783
  %1945 = vmax.xlane.f32.xlu0 %v1944
  %v1946 = vpop.xlane.xlu0 %1945
  %v1947 = vmax.f32 %v1787, %v1789
  %1948 = vmax.xlane.f32.xlu0 %v1947
  %v1949 = vpop.xlane.xlu0 %1948
  %v1950 = vmax.f32 %v1793, %v1795
  %1951 = vmax.xlane.f32.xlu0 %v1950
  %v1952 = vpop.xlane.xlu0 %1951
  %v1953 = vmax.f32 %v1799, %v1801
  %1954 = vmax.xlane.f32.xlu0 %v1953
  %v1955 = vpop.xlane.xlu0 %1954
  %v1956 = vmax.f32 %v1805, %v1807
  %1957 = vmax.xlane.f32.xlu0 %v1956
  %v1958 = vpop.xlane.xlu0 %1957
  %v1959 = vmax.f32 %v1811, %v1813
  %1960 = vmax.xlane.f32.xlu0 %v1959
  %v1961 = vpop.xlane.xlu0 %1960
  %v1962 = vmax.f32 %v1817, %v1819
  %1963 = vmax.xlane.f32.xlu0 %v1962
  %v1964 = vpop.xlane.xlu0 %1963
  %v1965 = vmax.f32 %v1823, %v1825
  %1966 = vmax.xlane.f32.xlu0 %v1965
  %v1967 = vpop.xlane.xlu0 %1966
  %v1968 = vmax.f32 %v1829, %v1831
  %1969 = vmax.xlane.f32.xlu0 %v1968
  %v1970 = vpop.xlane.xlu0 %1969
  %v1971 = vmax.f32 %v1835, %v1837
  %1972 = vmax.xlane.f32.xlu0 %v1971
  %v1973 = vpop.xlane.xlu0 %1972
  %v1974 = vmax.f32 %v1841, %v1843
  %1975 = vmax.xlane.f32.xlu0 %v1974
  %v1976 = vpop.xlane.xlu0 %1975
  %v1977 = vmax.f32 %v1847, %v1849
  %1978 = vmax.xlane.f32.xlu0 %v1977
  %v1979 = vpop.xlane.xlu0 %1978
  %v1980 = vmax.f32 %v1853, %v1855
  %1981 = vmax.xlane.f32.xlu0 %v1980
  %v1982 = vpop.xlane.xlu0 %1981
  %v1983 = vmax.f32 %v1859, %v1861
  %1984 = vmax.xlane.f32.xlu0 %v1983
  %v1985 = vpop.xlane.xlu0 %1984
  %v1986 = vmax.f32 %v1865, %v1867
  %1987 = vmax.xlane.f32.xlu0 %v1986
  %v1988 = vpop.xlane.xlu0 %1987
  %v1989 = vmax.f32 %v1871, %v1873
  %1990 = vmax.xlane.f32.xlu0 %v1989
  %v1991 = vpop.xlane.xlu0 %1990
  %v1992 = vmax.f32 %v1877, %v1879
  %1993 = vmax.xlane.f32.xlu0 %v1992
  %v1994 = vpop.xlane.xlu0 %1993
  %v1995 = vmax.f32 %v1883, %v1885
  %1996 = vmax.xlane.f32.xlu0 %v1995
  %v1997 = vpop.xlane.xlu0 %1996
  %v1998 = vmax.f32 %v1889, %v1891
  %1999 = vmax.xlane.f32.xlu0 %v1998
  %v2000 = vpop.xlane.xlu0 %1999
  %v2001 = vmax.f32 %v1895, %v1897
  %2002 = vmax.xlane.f32.xlu0 %v2001
  %v2003 = vpop.xlane.xlu0 %2002
  %v2004 = vmax.f32 %v1901, %v1903
  %2005 = vmax.xlane.f32.xlu0 %v2004
  %v2006 = vpop.xlane.xlu0 %2005
  %v2007 = vmax.f32 %v1907, %v1909
  %2008 = vmax.xlane.f32.xlu0 %v2007
  %v2009 = vpop.xlane.xlu0 %2008
  %v2010 = vmax.f32 %v1913, %v1915
  %2011 = vmax.xlane.f32.xlu0 %v2010
  %v2012 = vpop.xlane.xlu0 %2011
  %v2013 = vsub.f32 %v1727, %v1919
  %v2014 = vsub.f32 %v1729, %v1919
  %v2015 = vsub.f32 %v1733, %v1922
  %v2016 = vsub.f32 %v1735, %v1922
  %v2017 = vsub.f32 %v1739, %v1925
  %v2018 = vsub.f32 %v1741, %v1925
  %v2019 = vsub.f32 %v1745, %v1928
  %v2020 = vsub.f32 %v1747, %v1928
  %v2021 = vsub.f32 %v1751, %v1931
  %v2022 = vsub.f32 %v1753, %v1931
  %v2023 = vsub.f32 %v1757, %v1934
  %v2024 = vsub.f32 %v1759, %v1934
  %v2025 = vsub.f32 %v1763, %v1937
  %v2026 = vsub.f32 %v1765, %v1937
  %v2027 = vsub.f32 %v1769, %v1940
  %v2028 = vsub.f32 %v1771, %v1940
  %v2029 = vsub.f32 %v1775, %v1943
  %v2030 = vsub.f32 %v1777, %v1943
  %v2031 = vsub.f32 %v1781, %v1946
  %v2032 = vsub.f32 %v1783, %v1946
  %v2033 = vsub.f32 %v1787, %v1949
  %v2034 = vsub.f32 %v1789, %v1949
  %v2035 = vsub.f32 %v1793, %v1952
  %v2036 = vsub.f32 %v1795, %v1952
  %v2037 = vsub.f32 %v1799, %v1955
  %v2038 = vsub.f32 %v1801, %v1955
  %v2039 = vsub.f32 %v1805, %v1958
  %v2040 = vsub.f32 %v1807, %v1958
  %v2041 = vsub.f32 %v1811, %v1961
  %v2042 = vsub.f32 %v1813, %v1961
  %v2043 = vsub.f32 %v1817, %v1964
  %v2044 = vsub.f32 %v1819, %v1964
  %v2045 = vsub.f32 %v1823, %v1967
  %v2046 = vsub.f32 %v1825, %v1967
  %v2047 = vsub.f32 %v1829, %v1970
  %v2048 = vsub.f32 %v1831, %v1970
  %v2049 = vsub.f32 %v1835, %v1973
  %v2050 = vsub.f32 %v1837, %v1973
  %v2051 = vsub.f32 %v1841, %v1976
  %v2052 = vsub.f32 %v1843, %v1976
  %v2053 = vsub.f32 %v1847, %v1979
  %v2054 = vsub.f32 %v1849, %v1979
  %v2055 = vsub.f32 %v1853, %v1982
  %v2056 = vsub.f32 %v1855, %v1982
  %v2057 = vsub.f32 %v1859, %v1985
  %v2058 = vsub.f32 %v1861, %v1985
  %v2059 = vsub.f32 %v1865, %v1988
  %v2060 = vsub.f32 %v1867, %v1988
  %v2061 = vsub.f32 %v1871, %v1991
  %v2062 = vsub.f32 %v1873, %v1991
  %v2063 = vsub.f32 %v1877, %v1994
  %v2064 = vsub.f32 %v1879, %v1994
  %v2065 = vsub.f32 %v1883, %v1997
  %v2066 = vsub.f32 %v1885, %v1997
  %v2067 = vsub.f32 %v1889, %v2000
  %v2068 = vsub.f32 %v1891, %v2000
  %v2069 = vsub.f32 %v1895, %v2003
  %v2070 = vsub.f32 %v1897, %v2003
  %v2071 = vsub.f32 %v1901, %v2006
  %v2072 = vsub.f32 %v1903, %v2006
  %v2073 = vsub.f32 %v1907, %v2009
  %v2074 = vsub.f32 %v1909, %v2009
  %v2075 = vsub.f32 %v1913, %v2012
  %v2076 = vsub.f32 %v1915, %v2012
  %v2077 = vmul.f32 %v2013, 1.442695
  %v2078 = vpow.pop %v2077
  %v2079 = vmul.f32 %v2014, 1.442695
  %v2080 = vpow.pop %v2079
  %v2081 = vmul.f32 %v2015, 1.442695
  %v2082 = vpow.pop %v2081
  %v2083 = vmul.f32 %v2016, 1.442695
  %v2084 = vpow.pop %v2083
  %v2085 = vmul.f32 %v2017, 1.442695
  %v2086 = vpow.pop %v2085
  %v2087 = vmul.f32 %v2018, 1.442695
  %v2088 = vpow.pop %v2087
  %v2089 = vmul.f32 %v2019, 1.442695
  %v2090 = vpow.pop %v2089
  %v2091 = vmul.f32 %v2020, 1.442695
  %v2092 = vpow.pop %v2091
  %v2093 = vmul.f32 %v2021, 1.442695
  %v2094 = vpow.pop %v2093
  %v2095 = vmul.f32 %v2022, 1.442695
  %v2096 = vpow.pop %v2095
  %v2097 = vmul.f32 %v2023, 1.442695
  %v2098 = vpow.pop %v2097
  %v2099 = vmul.f32 %v2024, 1.442695
  %v2100 = vpow.pop %v2099
  %v2101 = vmul.f32 %v2025, 1.442695
  %v2102 = vpow.pop %v2101
  %v2103 = vmul.f32 %v2026, 1.442695
  %v2104 = vpow.pop %v2103
  %v2105 = vmul.f32 %v2027, 1.442695
  %v2106 = vpow.pop %v2105
  %v2107 = vmul.f32 %v2028, 1.442695
  %v2108 = vpow.pop %v2107
  %v2109 = vmul.f32 %v2029, 1.442695
  %v2110 = vpow.pop %v2109
  %v2111 = vmul.f32 %v2030, 1.442695
  %v2112 = vpow.pop %v2111
  %v2113 = vmul.f32 %v2031, 1.442695
  %v2114 = vpow.pop %v2113
  %v2115 = vmul.f32 %v2032, 1.442695
  %v2116 = vpow.pop %v2115
  %v2117 = vmul.f32 %v2033, 1.442695
  %v2118 = vpow.pop %v2117
  %v2119 = vmul.f32 %v2034, 1.442695
  %v2120 = vpow.pop %v2119
  %v2121 = vmul.f32 %v2035, 1.442695
  %v2122 = vpow.pop %v2121
  %v2123 = vmul.f32 %v2036, 1.442695
  %v2124 = vpow.pop %v2123
  %v2125 = vmul.f32 %v2037, 1.442695
  %v2126 = vpow.pop %v2125
  %v2127 = vmul.f32 %v2038, 1.442695
  %v2128 = vpow.pop %v2127
  %v2129 = vmul.f32 %v2039, 1.442695
  %v2130 = vpow.pop %v2129
  %v2131 = vmul.f32 %v2040, 1.442695
  %v2132 = vpow.pop %v2131
  %v2133 = vmul.f32 %v2041, 1.442695
  %v2134 = vpow.pop %v2133
  %v2135 = vmul.f32 %v2042, 1.442695
  %v2136 = vpow.pop %v2135
  %v2137 = vmul.f32 %v2043, 1.442695
  %v2138 = vpow.pop %v2137
  %v2139 = vmul.f32 %v2044, 1.442695
  %v2140 = vpow.pop %v2139
  %v2141 = vmul.f32 %v2045, 1.442695
  %v2142 = vpow.pop %v2141
  %v2143 = vmul.f32 %v2046, 1.442695
  %v2144 = vpow.pop %v2143
  %v2145 = vmul.f32 %v2047, 1.442695
  %v2146 = vpow.pop %v2145
  %v2147 = vmul.f32 %v2048, 1.442695
  %v2148 = vpow.pop %v2147
  %v2149 = vmul.f32 %v2049, 1.442695
  %v2150 = vpow.pop %v2149
  %v2151 = vmul.f32 %v2050, 1.442695
  %v2152 = vpow.pop %v2151
  %v2153 = vmul.f32 %v2051, 1.442695
  %v2154 = vpow.pop %v2153
  %v2155 = vmul.f32 %v2052, 1.442695
  %v2156 = vpow.pop %v2155
  %v2157 = vmul.f32 %v2053, 1.442695
  %v2158 = vpow.pop %v2157
  %v2159 = vmul.f32 %v2054, 1.442695
  %v2160 = vpow.pop %v2159
  %v2161 = vmul.f32 %v2055, 1.442695
  %v2162 = vpow.pop %v2161
  %v2163 = vmul.f32 %v2056, 1.442695
  %v2164 = vpow.pop %v2163
  %v2165 = vmul.f32 %v2057, 1.442695
  %v2166 = vpow.pop %v2165
  %v2167 = vmul.f32 %v2058, 1.442695
  %v2168 = vpow.pop %v2167
  %v2169 = vmul.f32 %v2059, 1.442695
  %v2170 = vpow.pop %v2169
  %v2171 = vmul.f32 %v2060, 1.442695
  %v2172 = vpow.pop %v2171
  %v2173 = vmul.f32 %v2061, 1.442695
  %v2174 = vpow.pop %v2173
  %v2175 = vmul.f32 %v2062, 1.442695
  %v2176 = vpow.pop %v2175
  %v2177 = vmul.f32 %v2063, 1.442695
  %v2178 = vpow.pop %v2177
  %v2179 = vmul.f32 %v2064, 1.442695
  %v2180 = vpow.pop %v2179
  %v2181 = vmul.f32 %v2065, 1.442695
  %v2182 = vpow.pop %v2181
  %v2183 = vmul.f32 %v2066, 1.442695
  %v2184 = vpow.pop %v2183
  %v2185 = vmul.f32 %v2067, 1.442695
  %v2186 = vpow.pop %v2185
  %v2187 = vmul.f32 %v2068, 1.442695
  %v2188 = vpow.pop %v2187
  %v2189 = vmul.f32 %v2069, 1.442695
  %v2190 = vpow.pop %v2189
  %v2191 = vmul.f32 %v2070, 1.442695
  %v2192 = vpow.pop %v2191
  %v2193 = vmul.f32 %v2071, 1.442695
  %v2194 = vpow.pop %v2193
  %v2195 = vmul.f32 %v2072, 1.442695
  %v2196 = vpow.pop %v2195
  %v2197 = vmul.f32 %v2073, 1.442695
  %v2198 = vpow.pop %v2197
  %v2199 = vmul.f32 %v2074, 1.442695
  %v2200 = vpow.pop %v2199
  %v2201 = vmul.f32 %v2075, 1.442695
  %v2202 = vpow.pop %v2201
  %v2203 = vmul.f32 %v2076, 1.442695
  %v2204 = vpow.pop %v2203
  %v2205 = vadd.f32 %v2078, %v2080
  %2206 = vadd.xlane.f32.xlu0 %v2205
  %v2207 = vpop.xlane.xlu0 %2206
  %v2208 = vadd.f32 %v2082, %v2084
  %2209 = vadd.xlane.f32.xlu0 %v2208
  %v2210 = vpop.xlane.xlu0 %2209
  %v2211 = vadd.f32 %v2086, %v2088
  %2212 = vadd.xlane.f32.xlu0 %v2211
  %v2213 = vpop.xlane.xlu0 %2212
  %v2214 = vadd.f32 %v2090, %v2092
  %2215 = vadd.xlane.f32.xlu0 %v2214
  %v2216 = vpop.xlane.xlu0 %2215
  %v2217 = vadd.f32 %v2094, %v2096
  %2218 = vadd.xlane.f32.xlu0 %v2217
  %v2219 = vpop.xlane.xlu0 %2218
  %v2220 = vadd.f32 %v2098, %v2100
  %2221 = vadd.xlane.f32.xlu0 %v2220
  %v2222 = vpop.xlane.xlu0 %2221
  %v2223 = vadd.f32 %v2102, %v2104
  %2224 = vadd.xlane.f32.xlu0 %v2223
  %v2225 = vpop.xlane.xlu0 %2224
  %v2226 = vadd.f32 %v2106, %v2108
  %2227 = vadd.xlane.f32.xlu0 %v2226
  %v2228 = vpop.xlane.xlu0 %2227
  %v2229 = vadd.f32 %v2110, %v2112
  %2230 = vadd.xlane.f32.xlu0 %v2229
  %v2231 = vpop.xlane.xlu0 %2230
  %v2232 = vadd.f32 %v2114, %v2116
  %2233 = vadd.xlane.f32.xlu0 %v2232
  %v2234 = vpop.xlane.xlu0 %2233
  %v2235 = vadd.f32 %v2118, %v2120
  %2236 = vadd.xlane.f32.xlu0 %v2235
  %v2237 = vpop.xlane.xlu0 %2236
  %v2238 = vadd.f32 %v2122, %v2124
  %2239 = vadd.xlane.f32.xlu0 %v2238
  %v2240 = vpop.xlane.xlu0 %2239
  %v2241 = vadd.f32 %v2126, %v2128
  %2242 = vadd.xlane.f32.xlu0 %v2241
  %v2243 = vpop.xlane.xlu0 %2242
  %v2244 = vadd.f32 %v2130, %v2132
  %2245 = vadd.xlane.f32.xlu0 %v2244
  %v2246 = vpop.xlane.xlu0 %2245
  %v2247 = vadd.f32 %v2134, %v2136
  %2248 = vadd.xlane.f32.xlu0 %v2247
  %v2249 = vpop.xlane.xlu0 %2248
  %v2250 = vadd.f32 %v2138, %v2140
  %2251 = vadd.xlane.f32.xlu0 %v2250
  %v2252 = vpop.xlane.xlu0 %2251
  %v2253 = vadd.f32 %v2142, %v2144
  %2254 = vadd.xlane.f32.xlu0 %v2253
  %v2255 = vpop.xlane.xlu0 %2254
  %v2256 = vadd.f32 %v2146, %v2148
  %2257 = vadd.xlane.f32.xlu0 %v2256
  %v2258 = vpop.xlane.xlu0 %2257
  %v2259 = vadd.f32 %v2150, %v2152
  %2260 = vadd.xlane.f32.xlu0 %v2259
  %v2261 = vpop.xlane.xlu0 %2260
  %v2262 = vadd.f32 %v2154, %v2156
  %2263 = vadd.xlane.f32.xlu0 %v2262
  %v2264 = vpop.xlane.xlu0 %2263
  %v2265 = vadd.f32 %v2158, %v2160
  %2266 = vadd.xlane.f32.xlu0 %v2265
  %v2267 = vpop.xlane.xlu0 %2266
  %v2268 = vadd.f32 %v2162, %v2164
  %2269 = vadd.xlane.f32.xlu0 %v2268
  %v2270 = vpop.xlane.xlu0 %2269
  %v2271 = vadd.f32 %v2166, %v2168
  %2272 = vadd.xlane.f32.xlu0 %v2271
  %v2273 = vpop.xlane.xlu0 %2272
  %v2274 = vadd.f32 %v2170, %v2172
  %2275 = vadd.xlane.f32.xlu0 %v2274
  %v2276 = vpop.xlane.xlu0 %2275
  %v2277 = vadd.f32 %v2174, %v2176
  %2278 = vadd.xlane.f32.xlu0 %v2277
  %v2279 = vpop.xlane.xlu0 %2278
  %v2280 = vadd.f32 %v2178, %v2180
  %2281 = vadd.xlane.f32.xlu0 %v2280
  %v2282 = vpop.xlane.xlu0 %2281
  %v2283 = vadd.f32 %v2182, %v2184
  %2284 = vadd.xlane.f32.xlu0 %v2283
  %v2285 = vpop.xlane.xlu0 %2284
  %v2286 = vadd.f32 %v2186, %v2188
  %2287 = vadd.xlane.f32.xlu0 %v2286
  %v2288 = vpop.xlane.xlu0 %2287
  %v2289 = vadd.f32 %v2190, %v2192
  %2290 = vadd.xlane.f32.xlu0 %v2289
  %v2291 = vpop.xlane.xlu0 %2290
  %v2292 = vadd.f32 %v2194, %v2196
  %2293 = vadd.xlane.f32.xlu0 %v2292
  %v2294 = vpop.xlane.xlu0 %2293
  %v2295 = vadd.f32 %v2198, %v2200
  %2296 = vadd.xlane.f32.xlu0 %v2295
  %v2297 = vpop.xlane.xlu0 %2296
  %v2298 = vadd.f32 %v2202, %v2204
  %2299 = vadd.xlane.f32.xlu0 %v2298
  %v2300 = vpop.xlane.xlu0 %2299
  %v2301 = vrcp.pop %v2207
  %v2302 = vrcp.pop %v2210
  %v2303 = vrcp.pop %v2213
  %v2304 = vrcp.pop %v2216
  %v2305 = vrcp.pop %v2219
  %v2306 = vrcp.pop %v2222
  %v2307 = vrcp.pop %v2225
  %v2308 = vrcp.pop %v2228
  %v2309 = vrcp.pop %v2231
  %v2310 = vrcp.pop %v2234
  %v2311 = vrcp.pop %v2237
  %v2312 = vrcp.pop %v2240
  %v2313 = vrcp.pop %v2243
  %v2314 = vrcp.pop %v2246
  %v2315 = vrcp.pop %v2249
  %v2316 = vrcp.pop %v2252
  %v2317 = vrcp.pop %v2255
  %v2318 = vrcp.pop %v2258
  %v2319 = vrcp.pop %v2261
  %v2320 = vrcp.pop %v2264
  %v2321 = vrcp.pop %v2267
  %v2322 = vrcp.pop %v2270
  %v2323 = vrcp.pop %v2273
  %v2324 = vrcp.pop %v2276
  %v2325 = vrcp.pop %v2279
  %v2326 = vrcp.pop %v2282
  %v2327 = vrcp.pop %v2285
  %v2328 = vrcp.pop %v2288
  %v2329 = vrcp.pop %v2291
  %v2330 = vrcp.pop %v2294
  %v2331 = vrcp.pop %v2297
  %v2332 = vrcp.pop %v2300
  %v2333 = vmul.f32 %v2207, %v2301
  %v2334 = vmul.f32 %v2210, %v2302
  %v2335 = vmul.f32 %v2213, %v2303
  %v2336 = vmul.f32 %v2216, %v2304
  %v2337 = vmul.f32 %v2219, %v2305
  %v2338 = vmul.f32 %v2222, %v2306
  %v2339 = vmul.f32 %v2225, %v2307
  %v2340 = vmul.f32 %v2228, %v2308
  %v2341 = vmul.f32 %v2231, %v2309
  %v2342 = vmul.f32 %v2234, %v2310
  %v2343 = vmul.f32 %v2237, %v2311
  %v2344 = vmul.f32 %v2240, %v2312
  %v2345 = vmul.f32 %v2243, %v2313
  %v2346 = vmul.f32 %v2246, %v2314
  %v2347 = vmul.f32 %v2249, %v2315
  %v2348 = vmul.f32 %v2252, %v2316
  %v2349 = vmul.f32 %v2255, %v2317
  %v2350 = vmul.f32 %v2258, %v2318
  %v2351 = vmul.f32 %v2261, %v2319
  %v2352 = vmul.f32 %v2264, %v2320
  %v2353 = vmul.f32 %v2267, %v2321
  %v2354 = vmul.f32 %v2270, %v2322
  %v2355 = vmul.f32 %v2273, %v2323
  %v2356 = vmul.f32 %v2276, %v2324
  %v2357 = vmul.f32 %v2279, %v2325
  %v2358 = vmul.f32 %v2282, %v2326
  %v2359 = vmul.f32 %v2285, %v2327
  %v2360 = vmul.f32 %v2288, %v2328
  %v2361 = vmul.f32 %v2291, %v2329
  %v2362 = vmul.f32 %v2294, %v2330
  %v2363 = vmul.f32 %v2297, %v2331
  %v2364 = vmul.f32 %v2300, %v2332
  %v2365 = vsub.f32 2.0, %v2333
  %v2366 = vsub.f32 2.0, %v2334
  %v2367 = vsub.f32 2.0, %v2335
  %v2368 = vsub.f32 2.0, %v2336
  %v2369 = vsub.f32 2.0, %v2337
  %v2370 = vsub.f32 2.0, %v2338
  %v2371 = vsub.f32 2.0, %v2339
  %v2372 = vsub.f32 2.0, %v2340
  %v2373 = vsub.f32 2.0, %v2341
  %v2374 = vsub.f32 2.0, %v2342
  %v2375 = vsub.f32 2.0, %v2343
  %v2376 = vsub.f32 2.0, %v2344
  %v2377 = vsub.f32 2.0, %v2345
  %v2378 = vsub.f32 2.0, %v2346
  %v2379 = vsub.f32 2.0, %v2347
  %v2380 = vsub.f32 2.0, %v2348
  %v2381 = vsub.f32 2.0, %v2349
  %v2382 = vsub.f32 2.0, %v2350
  %v2383 = vsub.f32 2.0, %v2351
  %v2384 = vsub.f32 2.0, %v2352
  %v2385 = vsub.f32 2.0, %v2353
  %v2386 = vsub.f32 2.0, %v2354
  %v2387 = vsub.f32 2.0, %v2355
  %v2388 = vsub.f32 2.0, %v2356
  %v2389 = vsub.f32 2.0, %v2357
  %v2390 = vsub.f32 2.0, %v2358
  %v2391 = vsub.f32 2.0, %v2359
  %v2392 = vsub.f32 2.0, %v2360
  %v2393 = vsub.f32 2.0, %v2361
  %v2394 = vsub.f32 2.0, %v2362
  %v2395 = vsub.f32 2.0, %v2363
  %v2396 = vsub.f32 2.0, %v2364
  %v2397 = vmul.f32 %v2301, %v2365
  %v2398 = vmul.f32 %v2302, %v2366
  %v2399 = vmul.f32 %v2303, %v2367
  %v2400 = vmul.f32 %v2304, %v2368
  %v2401 = vmul.f32 %v2305, %v2369
  %v2402 = vmul.f32 %v2306, %v2370
  %v2403 = vmul.f32 %v2307, %v2371
  %v2404 = vmul.f32 %v2308, %v2372
  %v2405 = vmul.f32 %v2309, %v2373
  %v2406 = vmul.f32 %v2310, %v2374
  %v2407 = vmul.f32 %v2311, %v2375
  %v2408 = vmul.f32 %v2312, %v2376
  %v2409 = vmul.f32 %v2313, %v2377
  %v2410 = vmul.f32 %v2314, %v2378
  %v2411 = vmul.f32 %v2315, %v2379
  %v2412 = vmul.f32 %v2316, %v2380
  %v2413 = vmul.f32 %v2317, %v2381
  %v2414 = vmul.f32 %v2318, %v2382
  %v2415 = vmul.f32 %v2319, %v2383
  %v2416 = vmul.f32 %v2320, %v2384
  %v2417 = vmul.f32 %v2321, %v2385
  %v2418 = vmul.f32 %v2322, %v2386
  %v2419 = vmul.f32 %v2323, %v2387
  %v2420 = vmul.f32 %v2324, %v2388
  %v2421 = vmul.f32 %v2325, %v2389
  %v2422 = vmul.f32 %v2326, %v2390
  %v2423 = vmul.f32 %v2327, %v2391
  %v2424 = vmul.f32 %v2328, %v2392
  %v2425 = vmul.f32 %v2329, %v2393
  %v2426 = vmul.f32 %v2330, %v2394
  %v2427 = vmul.f32 %v2331, %v2395
  %v2428 = vmul.f32 %v2332, %v2396
  %v2429 = vmul.f32 %v2078, %v2397
  %v2430 = vmul.f32 %v2080, %v2397
  %v2431 = vmul.f32 %v2082, %v2398
  %v2432 = vmul.f32 %v2084, %v2398
  %v2433 = vmul.f32 %v2086, %v2399
  %v2434 = vmul.f32 %v2088, %v2399
  %v2435 = vmul.f32 %v2090, %v2400
  %v2436 = vmul.f32 %v2092, %v2400
  %v2437 = vmul.f32 %v2094, %v2401
  %v2438 = vmul.f32 %v2096, %v2401
  %v2439 = vmul.f32 %v2098, %v2402
  %v2440 = vmul.f32 %v2100, %v2402
  %v2441 = vmul.f32 %v2102, %v2403
  %v2442 = vmul.f32 %v2104, %v2403
  %v2443 = vmul.f32 %v2106, %v2404
  %v2444 = vmul.f32 %v2108, %v2404
  %v2445 = vmul.f32 %v2110, %v2405
  %v2446 = vmul.f32 %v2112, %v2405
  %v2447 = vmul.f32 %v2114, %v2406
  %v2448 = vmul.f32 %v2116, %v2406
  %v2449 = vmul.f32 %v2118, %v2407
  %v2450 = vmul.f32 %v2120, %v2407
  %v2451 = vmul.f32 %v2122, %v2408
  %v2452 = vmul.f32 %v2124, %v2408
  %v2453 = vmul.f32 %v2126, %v2409
  %v2454 = vmul.f32 %v2128, %v2409
  %v2455 = vmul.f32 %v2130, %v2410
  %v2456 = vmul.f32 %v2132, %v2410
  %v2457 = vmul.f32 %v2134, %v2411
  %v2458 = vmul.f32 %v2136, %v2411
  %v2459 = vmul.f32 %v2138, %v2412
  %v2460 = vmul.f32 %v2140, %v2412
  %v2461 = vmul.f32 %v2142, %v2413
  %v2462 = vmul.f32 %v2144, %v2413
  %v2463 = vmul.f32 %v2146, %v2414
  %v2464 = vmul.f32 %v2148, %v2414
  %v2465 = vmul.f32 %v2150, %v2415
  %v2466 = vmul.f32 %v2152, %v2415
  %v2467 = vmul.f32 %v2154, %v2416
  %v2468 = vmul.f32 %v2156, %v2416
  %v2469 = vmul.f32 %v2158, %v2417
  %v2470 = vmul.f32 %v2160, %v2417
  %v2471 = vmul.f32 %v2162, %v2418
  %v2472 = vmul.f32 %v2164, %v2418
  %v2473 = vmul.f32 %v2166, %v2419
  %v2474 = vmul.f32 %v2168, %v2419
  %v2475 = vmul.f32 %v2170, %v2420
  %v2476 = vmul.f32 %v2172, %v2420
  %v2477 = vmul.f32 %v2174, %v2421
  %v2478 = vmul.f32 %v2176, %v2421
  %v2479 = vmul.f32 %v2178, %v2422
  %v2480 = vmul.f32 %v2180, %v2422
  %v2481 = vmul.f32 %v2182, %v2423
  %v2482 = vmul.f32 %v2184, %v2423
  %v2483 = vmul.f32 %v2186, %v2424
  %v2484 = vmul.f32 %v2188, %v2424
  %v2485 = vmul.f32 %v2190, %v2425
  %v2486 = vmul.f32 %v2192, %v2425
  %v2487 = vmul.f32 %v2194, %v2426
  %v2488 = vmul.f32 %v2196, %v2426
  %v2489 = vmul.f32 %v2198, %v2427
  %v2490 = vmul.f32 %v2200, %v2427
  %v2491 = vmul.f32 %v2202, %v2428
  %v2492 = vmul.f32 %v2204, %v2428
  %2493 = vmatprep.subr.mxu0 %v2430
  %2494 = vmatpush1.xpose.msra.mxu0 %v2429
  %2495 = vmatprep.subr.mxu0 %v2432
  %2496 = vmatpush1.xpose.msra.mxu0 %v2431
  %2497 = vmatprep.subr.mxu0 %v2434
  %2498 = vmatpush1.xpose.msra.mxu0 %v2433
  %2499 = vmatprep.subr.mxu0 %v2436
  %2500 = vmatpush1.xpose.msra.mxu0 %v2435
  %2501 = vmatprep.subr.mxu0 %v2438
  %2502 = vmatpush1.xpose.msra.mxu0 %v2437
  %2503 = vmatprep.subr.mxu0 %v2440
  %2504 = vmatpush1.xpose.msra.mxu0 %v2439
  %2505 = vmatprep.subr.mxu0 %v2442
  %2506 = vmatpush1.xpose.msra.mxu0 %v2441
  %2507 = vmatprep.subr.mxu0 %v2444
  %2508 = vmatpush1.xpose.msra.mxu0 %v2443
  %2509 = vmatprep.subr.mxu0 %v2446
  %2510 = vmatpush1.xpose.msra.mxu0 %v2445
  %2511 = vmatprep.subr.mxu0 %v2448
  %2512 = vmatpush1.xpose.msra.mxu0 %v2447
  %2513 = vmatprep.subr.mxu0 %v2450
  %2514 = vmatpush1.xpose.msra.mxu0 %v2449
  %2515 = vmatprep.subr.mxu0 %v2452
  %2516 = vmatpush1.xpose.msra.mxu0 %v2451
  %2517 = vmatprep.subr.mxu0 %v2454
  %2518 = vmatpush1.xpose.msra.mxu0 %v2453
  %2519 = vmatprep.subr.mxu0 %v2456
  %2520 = vmatpush1.xpose.msra.mxu0 %v2455
  %2521 = vmatprep.subr.mxu0 %v2458
  %2522 = vmatpush1.xpose.msra.mxu0 %v2457
  %2523 = vmatprep.subr.mxu0 %v2460
  %2524 = vmatpush1.xpose.msra.mxu0 %v2459
  %2525 = vmatprep.subr.mxu0 %v2462
  %2526 = vmatpush1.xpose.msra.mxu0 %v2461
  %2527 = vmatprep.subr.mxu0 %v2464
  %2528 = vmatpush1.xpose.msra.mxu0 %v2463
  %2529 = vmatprep.subr.mxu0 %v2466
  %2530 = vmatpush1.xpose.msra.mxu0 %v2465
  %2531 = vmatprep.subr.mxu0 %v2468
  %2532 = vmatpush1.xpose.msra.mxu0 %v2467
  %2533 = vmatprep.subr.mxu0 %v2470
  %2534 = vmatpush1.xpose.msra.mxu0 %v2469
  %2535 = vmatprep.subr.mxu0 %v2472
  %2536 = vmatpush1.xpose.msra.mxu0 %v2471
  %2537 = vmatprep.subr.mxu0 %v2474
  %2538 = vmatpush1.xpose.msra.mxu0 %v2473
  %2539 = vmatprep.subr.mxu0 %v2476
  %2540 = vmatpush1.xpose.msra.mxu0 %v2475
  %2541 = vmatprep.subr.mxu0 %v2478
  %2542 = vmatpush1.xpose.msra.mxu0 %v2477
  %2543 = vmatprep.subr.mxu0 %v2480
  %2544 = vmatpush1.xpose.msra.mxu0 %v2479
  %2545 = vmatprep.subr.mxu0 %v2482
  %2546 = vmatpush1.xpose.msra.mxu0 %v2481
  %2547 = vmatprep.subr.mxu0 %v2484
  %2548 = vmatpush1.xpose.msra.mxu0 %v2483
  %2549 = vmatprep.subr.mxu0 %v2486
  %2550 = vmatpush1.xpose.msra.mxu0 %v2485
  %2551 = vmatprep.subr.mxu0 %v2488
  %2552 = vmatpush1.xpose.msra.mxu0 %v2487
  %2553 = vmatprep.subr.mxu0 %v2490
  %2554 = vmatpush1.xpose.msra.mxu0 %v2489
  %2555 = vmatprep.subr.mxu0 %v2492
  %2556 = vmatpush1.xpose.msra.mxu0 %v2491
  %2557 = vmatprep.mubr.f32.mxu0 %v1498
  %2558 = vmatmul.mubr.f32.gmra.mrb[0].mxu0 %v1496
  %v2559 = vpop.f32.mrb[0].mxu0
  %v2560 = vadd.f32 0.0, %v2559
  %v2561 = vpop.f32.mrb[0].mxu0
  %v2562 = vadd.f32 0.0, %v2561
  %2563 = vdwg.mxu0
  %2564 = vmatprep.subr.mxu0 %v2562
  %2565 = vmatpush1.msra.mxu0 %v2560
  %2566 = vmatprep.subr.mxu0 0.0
  %2567 = vmatpush1.msra.mxu0 0.0
  %2568 = vmatprep.subr.mxu0 0.0
  %2569 = vmatpush1.msra.mxu0 0.0
  %2570 = vmatprep.subr.mxu0 0.0
  %2571 = vmatpush1.msra.mxu0 0.0
  %2572 = vmatprep.subr.mxu0 0.0
  %2573 = vmatpush1.msra.mxu0 0.0
  %2574 = vmatprep.subr.mxu0 0.0
  %2575 = vmatpush1.msra.mxu0 0.0
  %2576 = vmatprep.subr.mxu0 0.0
  %2577 = vmatpush1.msra.mxu0 0.0
  %2578 = vmatprep.subr.mxu0 0.0
  %2579 = vmatpush1.msra.mxu0 0.0
  %2580 = vmatprep.subr.mxu0 0.0
  %2581 = vmatpush1.msra.mxu0 0.0
  %2582 = vmatprep.subr.mxu0 0.0
  %2583 = vmatpush1.msra.mxu0 0.0
  %2584 = vmatprep.subr.mxu0 0.0
  %2585 = vmatpush1.msra.mxu0 0.0
  %2586 = vmatprep.subr.mxu0 0.0
  %2587 = vmatpush1.msra.mxu0 0.0
  %2588 = vmatprep.subr.mxu0 0.0
  %2589 = vmatpush1.msra.mxu0 0.0
  %2590 = vmatprep.subr.mxu0 0.0
  %2591 = vmatpush1.msra.mxu0 0.0
  %2592 = vmatprep.subr.mxu0 0.0
  %2593 = vmatpush1.msra.mxu0 0.0
  %2594 = vmatprep.subr.mxu0 0.0
  %2595 = vmatpush1.msra.mxu0 0.0
  %2596 = vmatprep.subr.mxu0 0.0
  %2597 = vmatpush1.msra.mxu0 0.0
  %2598 = vmatprep.subr.mxu0 0.0
  %2599 = vmatpush1.msra.mxu0 0.0
  %2600 = vmatprep.subr.mxu0 0.0
  %2601 = vmatpush1.msra.mxu0 0.0
  %2602 = vmatprep.subr.mxu0 0.0
  %2603 = vmatpush1.msra.mxu0 0.0
  %2604 = vmatprep.subr.mxu0 0.0
  %2605 = vmatpush1.msra.mxu0 0.0
  %2606 = vmatprep.subr.mxu0 0.0
  %2607 = vmatpush1.msra.mxu0 0.0
  %2608 = vmatprep.subr.mxu0 0.0
  %2609 = vmatpush1.msra.mxu0 0.0
  %2610 = vmatprep.subr.mxu0 0.0
  %2611 = vmatpush1.msra.mxu0 0.0
  %2612 = vmatprep.subr.mxu0 0.0
  %2613 = vmatpush1.msra.mxu0 0.0
  %2614 = vmatprep.subr.mxu0 0.0
  %2615 = vmatpush1.msra.mxu0 0.0
  %2616 = vmatprep.subr.mxu0 0.0
  %2617 = vmatpush1.msra.mxu0 0.0
  %2618 = vmatprep.subr.mxu0 0.0
  %2619 = vmatpush1.msra.mxu0 0.0
  %2620 = vmatprep.subr.mxu0 0.0
  %2621 = vmatpush1.msra.mxu0 0.0
  %2622 = vmatprep.subr.mxu0 0.0
  %2623 = vmatpush1.msra.mxu0 0.0
  %2624 = vmatprep.subr.mxu0 0.0
  %2625 = vmatpush1.msra.mxu0 0.0
  %2626 = vmatprep.subr.mxu0 0.0
  %2627 = vmatpush1.msra.mxu0 0.0
  %2628 = vmatprep.mubr.f32.mxu0 0.0
  %2629 = vmatmul.mubr.f32.gmra.mrb[0].mxu0 %v1291
  %v2630 = vpop.f32.mrb[0].mxu0
  %v2631 = vadd.f32 %v1288, %v2630
  %v2632 = vpop.f32.mrb[0].mxu0
  %v2633 = vadd.f32 %v1288, %v2632
  %2634 = vdwg.mxu0
  %s2635 = scalar_lea.vmem %s7, 16
  %2636 = vst [vmem:[%s2635] sm:$0xff] %v2631
  %2637 = vst [vmem:[%s2635 + $0x8] sm:$0xff] %v2633
  // Predicated region
  $region30: #{attention_head_forward.1} parent=0 // pred_check
    _
  $region31: #{attention_head_forward.1} parent=0 // pred_check_branch
    %2639 = sbr.rel (0) target = $region33
  $region32: #{attention_head_forward.1} parent=0 // pred_region
    _
  $region33: #{attention_head_forward.1} parent=0 // pred_fallthru
    _
  // Predicated region
  $region34: #{attention_head_forward.1} parent=0 // pred_check
    _
  $region35: #{attention_head_forward.1} parent=0 // pred_check_branch
    %2641 = sbr.rel (0) target = $region37
  $region36: #{attention_head_forward.1} parent=0 // pred_region
    _
  $region37: #{attention_head_forward.1} parent=0 // pred_fallthru
    _

</llo_original>
